<compile_context>
chip_gen: v7x
topology: tpu7x:2x2x1
jax: 0.10.0
libtpu: 0.0.40
codegen_flags: <defaults>
</compile_context>

<pallas_src>
import numpy as np
import jax
import jax.numpy as jnp
from jax.experimental import pallas as pl
from jax.experimental.pallas import tpu as pltpu

H = 256  # hidden size of every LSTM in the encoder


# --------------------- batched matmul + bias (MXU) kernel --------------------
def _matmul_bias_kernel(x_ref, w_ref, b_ref, o_ref):
    # x: (rows, D) f32, w: (D, out) bf16, b: (1, out) f32 -> o: (rows, out) f32
    o_ref[...] = (jnp.dot(x_ref[...].astype(jnp.bfloat16), w_ref[...],
                          preferred_element_type=jnp.float32) + b_ref[...])


def _matmul_bias(x2d, w, b, out_dim):
    rows = x2d.shape[0]
    return pl.pallas_call(
        _matmul_bias_kernel,
        out_shape=jax.ShapeDtypeStruct((rows, out_dim), jnp.float32),
        compiler_params=pltpu.CompilerParams(vmem_limit_bytes=24 << 20),
    )(x2d, w, b)


# ------------------------- fused BiLSTM recurrence ---------------------------
def _bilstm_step_kernel(lens_ref, gin_ref, whh_ref, o_ref, h_sc, c_sc):
    d = pl.program_id(0)            # direction: 0 = forward, 1 = backward
    t = pl.program_id(1)            # step index along the (flipped) time axis
    n_t = pl.num_programs(1)

    @pl.when(t == 0)                # each direction's pass re-initializes its state
    def _():
        h_sc[...] = jnp.zeros_like(h_sc)
        c_sc[...] = jnp.zeros_like(c_sc)

    h = h_sc[...]                   # (N, H) f32
    c = c_sc[...]                   # (N, H) f32

    # input projection + bias were precomputed; only the recurrent matmul runs here.
    gates = gin_ref[0] + jnp.dot(h.astype(whh_ref.dtype), whh_ref[0],
                                 preferred_element_type=jnp.float32)   # (N, 4H)

    i_g = jax.nn.sigmoid(gates[:, 0 * H:1 * H])
    f_g = jax.nn.sigmoid(gates[:, 1 * H:2 * H])
    g_g = jnp.tanh(gates[:, 2 * H:3 * H])
    o_g = jax.nn.sigmoid(gates[:, 3 * H:4 * H])

    c_new = f_g * c + i_g * g_g
    h_new = o_g * jnp.tanh(c_new)

    # validity computed in-kernel: no per-step mask DMA.
    time = jnp.where(d == 0, t, n_t - 1 - t)
    valid = time < lens_ref[...]                       # (N, 1) bool

    h_sc[...] = jnp.where(valid, h_new, h)             # freeze state on padding
    c_sc[...] = jnp.where(valid, c_new, c)
    o_ref[0] = jnp.where(valid, h_new, 0.0).astype(o_ref.dtype)   # zero padded outputs


def bilstm(x, lens_np, p):
    """Bidirectional LSTM with pack/pad_packed semantics.

    x: (T0, N_pad, D) f32, lens_np: np.int array (N_pad,).  Returns (T, N_pad, 2H) f32
    with T = max(lens) and layout [forward | backward] along the feature axis.
    """
    lens_np = np.asarray(lens_np)
    T = int(np.max(lens_np))
    x = x[:T]                                           # pad_packed trims to max(lens)
    _, N_pad, D = x.shape

    # ---- phase 1: hoisted input projection for BOTH directions, one big matmul ----
    rows = T * N_pad
    gates_in = _matmul_bias(x.reshape(rows, D), p['w_ih'], p['b'], 8 * H)
    gates_in = gates_in.reshape(T, N_pad, 8 * H)        # [fwd 4H | bwd 4H] per (t, n)

    # ---- phase 2: fused bidirectional recurrence ----------------------------------
    lens_col = jnp.asarray(lens_np, jnp.int32).reshape(N_pad, 1)
    # block index: time axis flipped for the backward lane; last-dim block = direction.
    tmap = lambda d, t: (t + d * (T - 1 - 2 * t), 0, d)

    out = pl.pallas_call(
        _bilstm_step_kernel,
        out_shape=jax.ShapeDtypeStruct((T, N_pad, 2 * H), jnp.float32),
        grid_spec=pltpu.PrefetchScalarGridSpec(
            num_scalar_prefetch=0,
            grid=(2, T),                                   # (direction, time)
            in_specs=[
                pl.BlockSpec((N_pad, 1), lambda d, t: (0, 0)),         # lens (once)
                pl.BlockSpec((1, N_pad, 4 * H), tmap),                 # precomp. gates
                pl.BlockSpec((1, H, 4 * H), lambda d, t: (d, 0, 0)),   # W_hh[d]
            ],
            # direction index selects the lane half -> bidirectional concat is free.
            out_specs=pl.BlockSpec((1, N_pad, H), tmap),
            scratch_shapes=[
                pltpu.VMEM((N_pad, H), jnp.float32),       # h carry (per direction pass)
                pltpu.VMEM((N_pad, H), jnp.float32),       # c carry
            ],
        ),
        compiler_params=pltpu.CompilerParams(
            dimension_semantics=("parallel", "arbitrary"),  # directions -> 2 TCs on v7x
            vmem_limit_bytes=24 << 20,
        ),
    )(lens_col, gates_in, p['w_hh'])
    return out


# ----------------------------- pBLSTM / Encoder ------------------------------
def pblstm_forward(x, lens_np, p):
    lens = np.asarray(lens_np).copy()
    out = bilstm(x, lens, p)                 # (T, N_pad, 2H), T = max(lens)
    T, N_pad, F = out.shape
    if T % 2 != 0:                           # mirror PyTorch odd-length handling
        out = out[:-1]
        lens[int(np.argmax(lens))] = T - 1
        T -= 1
    lens = lens // 2
    # single-transpose pyramidal downsample: pair adjacent frames along features.
    out = out.reshape(T // 2, 2, N_pad, F).transpose(0, 2, 1, 3).reshape(T // 2, N_pad, 2 * F)
    return out, lens


def linear_fused(x, w, b):
    """x: (T, N, F); w: (F, out) bf16; b: (1, out)."""
    T, N, F = x.shape
    out_dim = w.shape[1]
    y = _matmul_bias(x.reshape(T * N, F), w, b, out_dim)
    return y.reshape(T, N, out_dim)


def encoder_forward(params, x, lens):
    lens = np.asarray(lens)
    _, N, _ = x.shape
    N_pad = ((N + 7) // 8) * 8               # pad batch to fp32 sublane multiple
    if N_pad != N:
        x = jnp.pad(x, ((0, 0), (0, N_pad - N), (0, 0)))
        lens_p = np.concatenate([lens, np.zeros(N_pad - N, dtype=lens.dtype)])
    else:
        lens_p = lens

    pad_out = bilstm(x, lens_p, params['lstm'])                       # (T,   Np, 512)
    ly1, l1 = pblstm_forward(pad_out, lens_p, params['pblstm'])       # (T/2, Np, 1024)
    ly2, l2 = pblstm_forward(ly1, l1, params['pblstm2'])              # (T/4, Np, 1024)
    ly3, l3 = pblstm_forward(ly2, l2, params['pblstm2'])              # same module reused
    kv = linear_fused(ly3, params['kv_w'], params['kv_b'])            # fused key|value
    keys = kv[:, :N, :128]
    value = kv[:, :N, 128:]
    # TODO(synk): PyTorch returns an int64 LongTensor; JAX default config uses int32 here.
    return keys, value, jnp.asarray(l3[:N], dtype=jnp.int32)


# ----------------------------- Parameter init --------------------------------
def init_lstm_params(key, input_dim, hidden=H):
    bound = 1.0 / np.sqrt(hidden)
    ks = jax.random.split(key, 8)
    u = lambda k_, shape: jax.random.uniform(k_, shape, jnp.float32, -bound, bound)
    w_ih, w_hh, b = [], [], []
    for i in (0, 4):                          # forward, backward
        wi = u(ks[i + 0], (4 * hidden, input_dim))
        wh = u(ks[i + 1], (4 * hidden, hidden))
        bi = u(ks[i + 2], (4 * hidden,))
        bh = u(ks[i + 3], (4 * hidden,))
        w_ih.append(jnp.transpose(wi))        # (D, 4H)
        w_hh.append(jnp.transpose(wh))        # (H, 4H)
        b.append(bi + bh)
    return {
        'w_ih': jnp.concatenate(w_ih, axis=1).astype(jnp.bfloat16),   # (D, 8H)
        'w_hh': jnp.stack(w_hh, axis=0).astype(jnp.bfloat16),         # (2, H, 4H)
        'b': jnp.concatenate(b, axis=0).reshape(1, 8 * hidden),       # (1, 8H) f32
    }


def init_encoder_params(key):
    ks = jax.random.split(key, 7)
    params = {
        'lstm': init_lstm_params(ks[0], 40),        # input_dim 40
        'pblstm': init_lstm_params(ks[1], 512),     # input_dim 256*2
        'pblstm2': init_lstm_params(ks[2], 1024),   # input_dim 512*2
    }
    kb = 1.0 / np.sqrt(1024.0)
    key_w = jax.random.uniform(ks[3], (128, 1024), jnp.float32, -kb, kb)
    key_b = jax.random.uniform(ks[4], (128,), jnp.float32, -kb, kb)
    value_w = jax.random.uniform(ks[5], (128, 1024), jnp.float32, -kb, kb)
    value_b = jax.random.uniform(ks[6], (128,), jnp.float32, -kb, kb)
    # fused key/value projection: one (1024, 256) weight, lane-dense output.
    params['kv_w'] = jnp.concatenate([key_w.T, value_w.T], axis=1).astype(jnp.bfloat16)
    params['kv_b'] = jnp.concatenate([key_b, value_b]).reshape(1, 256)
    return params


# ----------------------------------- main ------------------------------------
if __name__ == "__main__":
    rng = jax.random.PRNGKey(0)
    pkey, xkey = jax.random.split(rng)
    params = init_encoder_params(pkey)

    T, N, D_in = 14, 3, 40
    lens = np.array([14, 11, 9], dtype=np.int32)       # padded utterance lengths
    x = jax.random.normal(xkey, (T, N, D_in), jnp.float32)

    keys, value, out_lens = encoder_forward(params, x, lens)
    jax.block_until_ready((keys, value, out_lens))

    assert keys.shape == value.shape == (1, N, 128), (keys.shape, value.shape)
    assert out_lens.shape == (N,)
    print("KERNEL_OK")
</pallas_src>

<mosaic_0001>
module attributes {stable_mosaic.version = 11 : i64} {
  func.func @_matmul_bias_kernel(%arg0: memref<112x40xf32, #tpu.memory_space<vmem>>, %arg1: memref<40x2048xbf16, #tpu.memory_space<vmem>>, %arg2: memref<1x2048xf32, #tpu.memory_space<vmem>>, %arg3: memref<112x2048xf32, #tpu.memory_space<vmem>>) attributes {dimension_semantics = [], scalar_prefetch = 0 : i64, scratch_operands = 0 : i64, tpu.core_type = #tpu.core_type<tc>} {
    %c0 = arith.constant 0 : index
    %c0_0 = arith.constant 0 : index
    %0 = vector.load %arg0[%c0, %c0_0] : memref<112x40xf32, #tpu.memory_space<vmem>>, vector<112x40xf32>
    %1 = arith.truncf %0 : vector<112x40xf32> to vector<112x40xbf16>
    %c0_1 = arith.constant 0 : index
    %c0_2 = arith.constant 0 : index
    %2 = vector.load %arg1[%c0_1, %c0_2] : memref<40x2048xbf16, #tpu.memory_space<vmem>>, vector<40x2048xbf16>
    %cst = arith.constant dense<0.000000e+00> : vector<112x2048xf32>
    %3 = tpu.matmul %1, %2, %cst {dimension_numbers = #tpu.dot_dimension_numbers<[1], [0], [0], [1], [0, 0, 1, 1], [], []>} : vector<112x40xbf16>, vector<40x2048xbf16>, vector<112x2048xf32> -> vector<112x2048xf32>
    %c0_3 = arith.constant 0 : index
    %c0_4 = arith.constant 0 : index
    %4 = vector.load %arg2[%c0_3, %c0_4] : memref<1x2048xf32, #tpu.memory_space<vmem>>, vector<1x2048xf32>
    %5 = vector.broadcast %4 : vector<1x2048xf32> to vector<112x2048xf32>
    %6 = arith.addf %3, %5 : vector<112x2048xf32>
    %c0_5 = arith.constant 0 : index
    %c0_6 = arith.constant 0 : index
    %7 = vector.load %arg3[%c0_5, %c0_6] : memref<112x2048xf32, #tpu.memory_space<vmem>>, vector<112x2048xf32>
    tpu.vector_store %arg3[%c0_5, %c0_6], %6 {strides = array<i32>} : memref<112x2048xf32, #tpu.memory_space<vmem>>, vector<112x2048xf32>,
    return
  }
}

</mosaic_0001>

<llo_original>
// kernel: tpu_custom_call.1
$region0: #{tpu_custom_call.1}
  #allocation0 [shape = 'u32[]', space=smem, size = 0x4, offset = 0x4, fixed_abs, tag = 'smem constant byte address 0x4 - core index']
  #allocation1 [shape = 'u32[144,128]{1,0:T(1,128)}', space=vmem, size = 0x12000, scoped, tag = 'internal scratch']
  %s0 = inlined_call_operand.vmem [shape: f32[112,40], index: 0, kind: input, shape index: {}]
  %s1 = inlined_call_operand.hbm [shape: bf16[40,2048], index: 1, kind: input, shape index: {}]
  %s2 = inlined_call_operand.vmem [shape: f32[1,2048], index: 2, kind: input, shape index: {}]
  %s3 = inlined_call_operand.hbm [shape: f32[112,2048], index: 3, kind: output, shape index: {}]
  %s4 = sld [smem:[#allocation0]]
  $region26: #{tpu_custom_call.1} parent=0
    _
  %s6 = ssub.s32 1, %s4
  %s7 = scalar_select 0, %s6, %s4
  $region1: #{tpu_custom_call.1} parent=0
    #allocation2 [shape = 'u8[163840]{0}', space=vmem, size = 0x28000, scoped, tag = 'input window, operand 1, single buffered']
    #allocation3 [shape = 's32[1]{0}', space=sflag, size = 0x4, scoped, tag = 'scoped memory for tpu_custom_call.1']
    #allocation4 [shape = 's32[1]{0}', space=sflag, size = 0x4, scoped, tag = 'scoped memory for tpu_custom_call.1']
    #allocation5 [shape = 'u8[917504]{0}', space=vmem, size = 0xe0000, scoped, tag = 'output window, operand 0, single buffered']
    %8 = vsyncpa [#allocation3], 0
    %9 = vsyncpa [#allocation4], 0
    // Predicated region
    $region2: #{tpu_custom_call.1} parent=1 // pred_check
      _
    $region3: #{tpu_custom_call.1} parent=1 // pred_check_branch
      %11 = sbr.rel (0) target = $region5
    $region4: #{tpu_custom_call.1} parent=1 // pred_region
      _
    $region5: #{tpu_custom_call.1} parent=1 // pred_fallthru
      _
    // Predicated region
    $region6: #{tpu_custom_call.1} parent=1 // pred_check
      _
    $region7: #{tpu_custom_call.1} parent=1 // pred_check_branch
      %13 = sbr.rel (0) target = $region9
    $region8: #{tpu_custom_call.1} parent=1 // pred_region
      %s15 = ssub.s32 5120, 5120
      %16 = vsyncadd [#allocation3], %s15
      %s17 = sshll.u32 [#allocation2], 4
      %s18 = int_to_ptr.vmem [resolvable:$true] %s17
      %23 = dma.hbm_to_vmem [thread:$0]  %s1, 5120, %s18, [#allocation3], 1024, 1024, 64
    $region9: #{tpu_custom_call.1} parent=1 // pred_fallthru
      _
    // Predicated region
    $region10: #{tpu_custom_call.1} parent=1 // pred_check
      _
    $region11: #{tpu_custom_call.1} parent=1 // pred_check_branch
      %25 = sbr.rel (0) target = $region13
    $region12: #{tpu_custom_call.1} parent=1 // pred_region
      _
    $region13: #{tpu_custom_call.1} parent=1 // pred_fallthru
      _
    // Predicated region
    $region14: #{tpu_custom_call.1} parent=1 // pred_check
      _
    $region15: #{tpu_custom_call.1} parent=1 // pred_check_branch
      %27 = sbr.rel (0) target = $region17
    $region16: #{tpu_custom_call.1} parent=1 // pred_region
      %28 = dma.done [#allocation3], 5120
    $region17: #{tpu_custom_call.1} parent=1 // pred_fallthru
      _
    %v30 = vld [vmem:[%s0] sm:$0xff]
    %v31 = vld [vmem:[%s0 + $0x8] sm:$0xff]
    %v32 = vld [vmem:[%s0 + $0x10] sm:$0xff]
    %v33 = vld [vmem:[%s0 + $0x18] sm:$0xff]
    %v34 = vld [vmem:[%s0 + $0x20] sm:$0xff]
    %v35 = vld [vmem:[%s0 + $0x28] sm:$0xff]
    %v36 = vld [vmem:[%s0 + $0x30] sm:$0xff]
    %v37 = vld [vmem:[%s0 + $0x38] sm:$0xff]
    %v38 = vld [vmem:[%s0 + $0x40] sm:$0xff]
    %v39 = vld [vmem:[%s0 + $0x48] sm:$0xff]
    %v40 = vld [vmem:[%s0 + $0x50] sm:$0xff]
    %v41 = vld [vmem:[%s0 + $0x58] sm:$0xff]
    %v42 = vld [vmem:[%s0 + $0x60] sm:$0xff]
    %v43 = vld [vmem:[%s0 + $0x68] sm:$0xff]
    %v44 = vpack.c.bf16 %v31, %v30
    %v45 = vpack.c.bf16 %v33, %v32
    %v46 = vpack.c.bf16 %v35, %v34
    %v47 = vpack.c.bf16 %v37, %v36
    %v48 = vpack.c.bf16 %v39, %v38
    %v49 = vpack.c.bf16 %v41, %v40
    %v50 = vpack.c.bf16 %v43, %v42
    %v51 = vld [vmem:[#allocation2] sm:$0xff]
    %v52 = vld [vmem:[#allocation2 + $0x8] sm:$0xff]
    %v53 = vld [vmem:[#allocation2 + $0x10] sm:$0xff]
    %v54 = vld [vmem:[#allocation2 + $0x18] sm:$0xff]
    %v55 = vld [vmem:[#allocation2 + $0x20] sm:$0xff]
    %v56 = vld [vmem:[#allocation2 + $0x28] sm:$0xff]
    %v57 = vld [vmem:[#allocation2 + $0x30] sm:$0xff]
    %v58 = vld [vmem:[#allocation2 + $0x38] sm:$0xff]
    %v59 = vld [vmem:[#allocation2 + $0x40] sm:$0xff]
    %v60 = vld [vmem:[#allocation2 + $0x48] sm:$0xff]
    %v61 = vld [vmem:[#allocation2 + $0x50] sm:$0xff]
    %v62 = vld [vmem:[#allocation2 + $0x58] sm:$0xff]
    %v63 = vld [vmem:[#allocation2 + $0x60] sm:$0xff]
    %v64 = vld [vmem:[#allocation2 + $0x68] sm:$0xff]
    %v65 = vld [vmem:[#allocation2 + $0x70] sm:$0xff]
    %v66 = vld [vmem:[#allocation2 + $0x78] sm:$0xff]
    %v67 = vld [vmem:[#allocation2 + $0x80] sm:$0xff]
    %v68 = vld [vmem:[#allocation2 + $0x88] sm:$0xff]
    %v69 = vld [vmem:[#allocation2 + $0x90] sm:$0xff]
    %v70 = vld [vmem:[#allocation2 + $0x98] sm:$0xff]
    %v71 = vld [vmem:[#allocation2 + $0xa0] sm:$0xff]
    %v72 = vld [vmem:[#allocation2 + $0xa8] sm:$0xff]
    %v73 = vld [vmem:[#allocation2 + $0xb0] sm:$0xff]
    %v74 = vld [vmem:[#allocation2 + $0xb8] sm:$0xff]
    %v75 = vld [vmem:[#allocation2 + $0xc0] sm:$0xff]
    %v76 = vld [vmem:[#allocation2 + $0xc8] sm:$0xff]
    %v77 = vld [vmem:[#allocation2 + $0xd0] sm:$0xff]
    %v78 = vld [vmem:[#allocation2 + $0xd8] sm:$0xff]
    %v79 = vld [vmem:[#allocation2 + $0xe0] sm:$0xff]
    %v80 = vld [vmem:[#allocation2 + $0xe8] sm:$0xff]
    %v81 = vld [vmem:[#allocation2 + $0xf0] sm:$0xff]
    %v82 = vld [vmem:[#allocation2 + $0xf8] sm:$0xff]
    %v83 = vld [vmem:[#allocation2 + $0x100] sm:$0xff]
    %v84 = vld [vmem:[#allocation2 + $0x108] sm:$0xff]
    %v85 = vld [vmem:[#allocation2 + $0x110] sm:$0xff]
    %v86 = vld [vmem:[#allocation2 + $0x118] sm:$0xff]
    %v87 = vld [vmem:[#allocation2 + $0x120] sm:$0xff]
    %v88 = vld [vmem:[#allocation2 + $0x128] sm:$0xff]
    %v89 = vld [vmem:[#allocation2 + $0x130] sm:$0xff]
    %v90 = vld [vmem:[#allocation2 + $0x138] sm:$0xff]
    %v91 = vld [vmem:[%s2] sm:$0xff]
    %v92 = vld [vmem:[%s2 + $0x8] sm:$0xff]
    %v95 = vlaneseq
    %v96 = vshrl.u32 %v95, 7
    %v97 = vsub.s32 0, %v96
    %v98 = vrot.slane %v91, %v97
    %v99 = vlaneseq
    %v100 = vshrl.u32 %v99, 7
    %v101 = vsub.s32 1, %v100
    %v102 = vrot.slane %v91, %v101
    %v103 = vlaneseq
    %v104 = vshrl.u32 %v103, 7
    %v105 = vsub.s32 2, %v104
    %v106 = vrot.slane %v91, %v105
    %v107 = vlaneseq
    %v108 = vshrl.u32 %v107, 7
    %v109 = vsub.s32 3, %v108
    %v110 = vrot.slane %v91, %v109
    %v111 = vlaneseq
    %v112 = vshrl.u32 %v111, 7
    %v113 = vsub.s32 4, %v112
    %v114 = vrot.slane %v91, %v113
    %v115 = vlaneseq
    %v116 = vshrl.u32 %v115, 7
    %v117 = vsub.s32 5, %v116
    %v118 = vrot.slane %v91, %v117
    %v119 = vlaneseq
    %v120 = vshrl.u32 %v119, 7
    %v121 = vsub.s32 6, %v120
    %v122 = vrot.slane %v91, %v121
    %v123 = vlaneseq
    %v124 = vshrl.u32 %v123, 7
    %v125 = vsub.s32 7, %v124
    %v126 = vrot.slane %v91, %v125
    %v127 = vlaneseq
    %v128 = vshrl.u32 %v127, 7
    %v129 = vsub.s32 0, %v128
    %v130 = vrot.slane %v92, %v129
    %v131 = vlaneseq
    %v132 = vshrl.u32 %v131, 7
    %v133 = vsub.s32 1, %v132
    %v134 = vrot.slane %v92, %v133
    %v135 = vlaneseq
    %v136 = vshrl.u32 %v135, 7
    %v137 = vsub.s32 2, %v136
    %v138 = vrot.slane %v92, %v137
    %v139 = vlaneseq
    %v140 = vshrl.u32 %v139, 7
    %v141 = vsub.s32 3, %v140
    %v142 = vrot.slane %v92, %v141
    %v143 = vlaneseq
    %v144 = vshrl.u32 %v143, 7
    %v145 = vsub.s32 4, %v144
    %v146 = vrot.slane %v92, %v145
    %v147 = vlaneseq
    %v148 = vshrl.u32 %v147, 7
    %v149 = vsub.s32 5, %v148
    %v150 = vrot.slane %v92, %v149
    %v151 = vlaneseq
    %v152 = vshrl.u32 %v151, 7
    %v153 = vsub.s32 6, %v152
    %v154 = vrot.slane %v92, %v153
    %v155 = vlaneseq
    %v156 = vshrl.u32 %v155, 7
    %v157 = vsub.s32 7, %v156
    %v158 = vrot.slane %v92, %v157
    %v215 = vunpack.c.l.b16 %v51
    %v216 = vunpack.c.h.b16 %v51
    %v217 = vunpack.c.l.b16 %v52
    %v218 = vunpack.c.h.b16 %v52
    %v219 = vunpack.c.l.b16 %v53
    %v220 = vunpack.c.h.b16 %v53
    %v221 = vunpack.c.l.b16 %v54
    %v222 = vunpack.c.h.b16 %v54
    %v223 = vunpack.c.l.b16 %v55
    %v224 = vunpack.c.h.b16 %v55
    %v225 = vunpack.c.l.b16 %v56
    %v226 = vunpack.c.h.b16 %v56
    %v227 = vunpack.c.l.b16 %v57
    %v228 = vunpack.c.h.b16 %v57
    %v229 = vunpack.c.l.b16 %v58
    %v230 = vunpack.c.h.b16 %v58
    %v231 = vunpack.c.l.b16 %v59
    %v232 = vunpack.c.h.b16 %v59
    %v233 = vunpack.c.l.b16 %v60
    %v234 = vunpack.c.h.b16 %v60
    %v235 = vunpack.c.l.b16 %v61
    %v236 = vunpack.c.h.b16 %v61
    %v237 = vunpack.c.l.b16 %v62
    %v238 = vunpack.c.h.b16 %v62
    %v239 = vunpack.c.l.b16 %v63
    %v240 = vunpack.c.h.b16 %v63
    %v241 = vunpack.c.l.b16 %v64
    %v242 = vunpack.c.h.b16 %v64
    %v243 = vunpack.c.l.b16 %v65
    %v244 = vunpack.c.h.b16 %v65
    %v245 = vunpack.c.l.b16 %v66
    %v246 = vunpack.c.h.b16 %v66
    %v247 = vunpack.c.l.b16 %v67
    %v248 = vunpack.c.h.b16 %v67
    %v249 = vunpack.c.l.b16 %v68
    %v250 = vunpack.c.h.b16 %v68
    %v251 = vunpack.c.l.b16 %v69
    %v252 = vunpack.c.h.b16 %v69
    %v253 = vunpack.c.l.b16 %v70
    %v254 = vunpack.c.h.b16 %v70
    %v255 = vunpack.c.l.b16 %v71
    %v256 = vunpack.c.h.b16 %v71
    %v257 = vunpack.c.l.b16 %v72
    %v258 = vunpack.c.h.b16 %v72
    %v259 = vunpack.c.l.b16 %v73
    %v260 = vunpack.c.h.b16 %v73
    %v261 = vunpack.c.l.b16 %v74
    %v262 = vunpack.c.h.b16 %v74
    %v263 = vunpack.c.l.b16 %v75
    %v264 = vunpack.c.h.b16 %v75
    %v265 = vunpack.c.l.b16 %v76
    %v266 = vunpack.c.h.b16 %v76
    %v267 = vunpack.c.l.b16 %v77
    %v268 = vunpack.c.h.b16 %v77
    %v269 = vunpack.c.l.b16 %v78
    %v270 = vunpack.c.h.b16 %v78
    %v271 = vunpack.c.l.b16 %v79
    %v272 = vunpack.c.h.b16 %v79
    %v273 = vunpack.c.l.b16 %v80
    %v274 = vunpack.c.h.b16 %v80
    %v275 = vunpack.c.l.b16 %v81
    %v276 = vunpack.c.h.b16 %v81
    %v277 = vunpack.c.l.b16 %v82
    %v278 = vunpack.c.h.b16 %v82
    %v279 = vunpack.c.l.b16 %v83
    %v280 = vunpack.c.h.b16 %v83
    %v281 = vunpack.c.l.b16 %v84
    %v282 = vunpack.c.h.b16 %v84
    %v283 = vunpack.c.l.b16 %v85
    %v284 = vunpack.c.h.b16 %v85
    %v285 = vunpack.c.l.b16 %v86
    %v286 = vunpack.c.h.b16 %v86
    %v287 = vunpack.c.l.b16 %v87
    %v288 = vunpack.c.h.b16 %v87
    %v289 = vunpack.c.l.b16 %v88
    %v290 = vunpack.c.h.b16 %v88
    %v291 = vunpack.c.l.b16 %v89
    %v292 = vunpack.c.h.b16 %v89
    %v293 = vunpack.c.l.b16 %v90
    %v294 = vunpack.c.h.b16 %v90
    %v295 = vpack.c.b16 %v231, %v215
    %v296 = vpack.c.b16 %v232, %v216
    %v297 = vpack.c.b16 %v233, %v217
    %v298 = vpack.c.b16 %v234, %v218
    %v299 = vpack.c.b16 %v235, %v219
    %v300 = vpack.c.b16 %v236, %v220
    %v301 = vpack.c.b16 %v237, %v221
    %v302 = vpack.c.b16 %v238, %v222
    %v303 = vpack.c.b16 %v239, %v223
    %v304 = vpack.c.b16 %v240, %v224
    %v305 = vpack.c.b16 %v241, %v225
    %v306 = vpack.c.b16 %v242, %v226
    %v307 = vpack.c.b16 %v243, %v227
    %v308 = vpack.c.b16 %v244, %v228
    %v309 = vpack.c.b16 %v245, %v229
    %v310 = vpack.c.b16 %v246, %v230
    %v311 = vpack.c.b16 %v263, %v247
    %v312 = vpack.c.b16 %v264, %v248
    %v313 = vpack.c.b16 %v265, %v249
    %v314 = vpack.c.b16 %v266, %v250
    %v315 = vpack.c.b16 %v267, %v251
    %v316 = vpack.c.b16 %v268, %v252
    %v317 = vpack.c.b16 %v269, %v253
    %v318 = vpack.c.b16 %v270, %v254
    %v319 = vpack.c.b16 %v271, %v255
    %v320 = vpack.c.b16 %v272, %v256
    %v321 = vpack.c.b16 %v273, %v257
    %v322 = vpack.c.b16 %v274, %v258
    %v323 = vpack.c.b16 %v275, %v259
    %v324 = vpack.c.b16 %v276, %v260
    %v325 = vpack.c.b16 %v277, %v261
    %v326 = vpack.c.b16 %v278, %v262
    %v327 = vpack.c.b16 %v279, %v279
    %v328 = vpack.c.b16 %v280, %v280
    %v329 = vpack.c.b16 %v281, %v281
    %v330 = vpack.c.b16 %v282, %v282
    %v331 = vpack.c.b16 %v283, %v283
    %v332 = vpack.c.b16 %v284, %v284
    %v333 = vpack.c.b16 %v285, %v285
    %v334 = vpack.c.b16 %v286, %v286
    %v335 = vpack.c.b16 %v287, %v287
    %v336 = vpack.c.b16 %v288, %v288
    %v337 = vpack.c.b16 %v289, %v289
    %v338 = vpack.c.b16 %v290, %v290
    %v339 = vpack.c.b16 %v291, %v291
    %v340 = vpack.c.b16 %v292, %v292
    %v341 = vpack.c.b16 %v293, %v293
    %v342 = vpack.c.b16 %v294, %v294
    %vm375 = vcmask 326656
    %v377 = vsel %vm375, %v44, 0
    %v380 = vsel %vm375, %v45, 0
    %v383 = vsel %vm375, %v46, 0
    %v386 = vsel %vm375, %v47, 0
    %v389 = vsel %vm375, %v48, 0
    %v392 = vsel %vm375, %v49, 0
    %v395 = vsel %vm375, %v50, 0
    %vm397 = vcmask 1043456
    %v399 = vsel %vm397, %v327, 0
    %v402 = vsel %vm397, %v328, 0
    %v405 = vsel %vm397, %v329, 0
    %v408 = vsel %vm397, %v330, 0
    %v411 = vsel %vm397, %v331, 0
    %v414 = vsel %vm397, %v332, 0
    %v417 = vsel %vm397, %v333, 0
    %v420 = vsel %vm397, %v334, 0
    %v423 = vsel %vm397, %v335, 0
    %v426 = vsel %vm397, %v336, 0
    %v429 = vsel %vm397, %v337, 0
    %v432 = vsel %vm397, %v338, 0
    %v435 = vsel %vm397, %v339, 0
    %v438 = vsel %vm397, %v340, 0
    %v441 = vsel %vm397, %v341, 0
    %v444 = vsel %vm397, %v342, 0
    %446 = vmatprep.subr.bf16.mxu0 %v296
    %447 = vmatpush1.bf16.msra.mxu0 %v295
    %448 = vmatprep.subr.bf16.mxu0 %v312
    %449 = vmatpush1.bf16.msra.mxu0 %v311
    %450 = vmatprep.subr.bf16.mxu0 %v402
    %451 = vmatpush1.bf16.msra.mxu0 %v399
    %452 = vmatprep.subr.bf16.mxu0 0
    %453 = vmatpush1.bf16.msra.mxu0 0
    %454 = vmatprep.subr.bf16.mxu0 0
    %455 = vmatpush1.bf16.msra.mxu0 0
    %456 = vmatprep.subr.bf16.mxu0 0
    %457 = vmatpush1.bf16.msra.mxu0 0
    %458 = vmatprep.subr.bf16.mxu0 0
    %459 = vmatpush1.bf16.msra.mxu0 0
    %460 = vmatprep.subr.bf16.mxu0 0
    %461 = vmatpush1.bf16.msra.mxu0 0
    %462 = vmatprep.subr.bf16.mxu0 0
    %463 = vmatpush1.bf16.msra.mxu0 0
    %464 = vmatprep.subr.bf16.mxu0 0
    %465 = vmatpush1.bf16.msra.mxu0 0
    %466 = vmatprep.subr.bf16.mxu0 0
    %467 = vmatpush1.bf16.msra.mxu0 0
    %468 = vmatprep.subr.bf16.mxu0 0
    %469 = vmatpush1.bf16.msra.mxu0 0
    %470 = vmatprep.subr.bf16.mxu0 0
    %471 = vmatpush1.bf16.msra.mxu0 0
    %472 = vmatprep.subr.bf16.mxu0 0
    %473 = vmatpush1.bf16.msra.mxu0 0
    %474 = vmatprep.subr.bf16.mxu0 0
    %475 = vmatpush1.bf16.msra.mxu0 0
    %476 = vmatprep.subr.bf16.mxu0 0
    %477 = vmatpush1.bf16.msra.mxu0 0
    %478 = vmatprep.mubr.bf16.mxu0 0
    %479 = vmatmul.mubr.bf16.gmra.mrb[0].mxu0 %v377
    %v480 = vpop.f32.mrb[0].mxu0
    %v481 = vadd.f32 %v98, %v480
    %v482 = vpop.f32.mrb[0].mxu0
    %v483 = vadd.f32 %v102, %v482
    %v484 = vpop.f32.mrb[0].mxu0
    %v485 = vadd.f32 %v98, %v484
    %v486 = vpop.f32.mrb[0].mxu0
    %v487 = vadd.f32 %v102, %v486
    %488 = vmatprep.mubr.bf16.mxu0 0
    %489 = vmatmul.mubr.bf16.gmra.mrb[0].mxu0 %v380
    %v490 = vpop.f32.mrb[0].mxu0
    %v491 = vadd.f32 %v98, %v490
    %v492 = vpop.f32.mrb[0].mxu0
    %v493 = vadd.f32 %v102, %v492
    %v494 = vpop.f32.mrb[0].mxu0
    %v495 = vadd.f32 %v98, %v494
    %v496 = vpop.f32.mrb[0].mxu0
    %v497 = vadd.f32 %v102, %v496
    %498 = vmatprep.mubr.bf16.mxu0 0
    %499 = vmatmul.mubr.bf16.gmra.mrb[0].mxu0 %v383
    %v500 = vpop.f32.mrb[0].mxu0
    %v501 = vadd.f32 %v98, %v500
    %v502 = vpop.f32.mrb[0].mxu0
    %v503 = vadd.f32 %v102, %v502
    %v504 = vpop.f32.mrb[0].mxu0
    %v505 = vadd.f32 %v98, %v504
    %v506 = vpop.f32.mrb[0].mxu0
    %v507 = vadd.f32 %v102, %v506
    %508 = vmatprep.mubr.bf16.mxu0 0
    %509 = vmatmul.mubr.bf16.gmra.mrb[0].mxu0 %v386
    %v510 = vpop.f32.mrb[0].mxu0
    %v511 = vadd.f32 %v98, %v510
    %v512 = vpop.f32.mrb[0].mxu0
    %v513 = vadd.f32 %v102, %v512
    %v514 = vpop.f32.mrb[0].mxu0
    %v515 = vadd.f32 %v98, %v514
    %v516 = vpop.f32.mrb[0].mxu0
    %v517 = vadd.f32 %v102, %v516
    %518 = vmatprep.mubr.bf16.mxu0 0
    %519 = vmatmul.mubr.bf16.gmra.mrb[0].mxu0 %v389
    %v520 = vpop.f32.mrb[0].mxu0
    %v521 = vadd.f32 %v98, %v520
    %v522 = vpop.f32.mrb[0].mxu0
    %v523 = vadd.f32 %v102, %v522
    %v524 = vpop.f32.mrb[0].mxu0
    %v525 = vadd.f32 %v98, %v524
    %v526 = vpop.f32.mrb[0].mxu0
    %v527 = vadd.f32 %v102, %v526
    %528 = vmatprep.mubr.bf16.mxu0 0
    %529 = vmatmul.mubr.bf16.gmra.mrb[0].mxu0 %v392
    %v530 = vpop.f32.mrb[0].mxu0
    %v531 = vadd.f32 %v98, %v530
    %v532 = vpop.f32.mrb[0].mxu0
    %v533 = vadd.f32 %v102, %v532
    %v534 = vpop.f32.mrb[0].mxu0
    %v535 = vadd.f32 %v98, %v534
    %v536 = vpop.f32.mrb[0].mxu0
    %v537 = vadd.f32 %v102, %v536
    %538 = vmatprep.mubr.bf16.mxu0 0
    %539 = vmatmul.mubr.bf16.gmra.mrb[0].mxu0 %v395
    %v540 = vpop.f32.mrb[0].mxu0
    %v541 = vadd.f32 %v98, %v540
    %v542 = vpop.f32.mrb[0].mxu0
    %v543 = vadd.f32 %v102, %v542
    %v544 = vpop.f32.mrb[0].mxu0
    %v545 = vadd.f32 %v98, %v544
    %v546 = vpop.f32.mrb[0].mxu0
    %v547 = vadd.f32 %v102, %v546
    %548 = vdwg.mxu0
    %549 = vmatprep.subr.bf16.mxu0 %v298
    %550 = vmatpush1.bf16.msra.mxu0 %v297
    %551 = vmatprep.subr.bf16.mxu0 %v314
    %552 = vmatpush1.bf16.msra.mxu0 %v313
    %553 = vmatprep.subr.bf16.mxu0 %v408
    %554 = vmatpush1.bf16.msra.mxu0 %v405
    %555 = vmatprep.subr.bf16.mxu0 0
    %556 = vmatpush1.bf16.msra.mxu0 0
    %557 = vmatprep.subr.bf16.mxu0 0
    %558 = vmatpush1.bf16.msra.mxu0 0
    %559 = vmatprep.subr.bf16.mxu0 0
    %560 = vmatpush1.bf16.msra.mxu0 0
    %561 = vmatprep.subr.bf16.mxu0 0
    %562 = vmatpush1.bf16.msra.mxu0 0
    %563 = vmatprep.subr.bf16.mxu0 0
    %564 = vmatpush1.bf16.msra.mxu0 0
    %565 = vmatprep.subr.bf16.mxu0 0
    %566 = vmatpush1.bf16.msra.mxu0 0
    %567 = vmatprep.subr.bf16.mxu0 0
    %568 = vmatpush1.bf16.msra.mxu0 0
    %569 = vmatprep.subr.bf16.mxu0 0
    %570 = vmatpush1.bf16.msra.mxu0 0
    %571 = vmatprep.subr.bf16.mxu0 0
    %572 = vmatpush1.bf16.msra.mxu0 0
    %573 = vmatprep.subr.bf16.mxu0 0
    %574 = vmatpush1.bf16.msra.mxu0 0
    %575 = vmatprep.subr.bf16.mxu0 0
    %576 = vmatpush1.bf16.msra.mxu0 0
    %577 = vmatprep.subr.bf16.mxu0 0
    %578 = vmatpush1.bf16.msra.mxu0 0
    %579 = vmatprep.subr.bf16.mxu0 0
    %580 = vmatpush1.bf16.msra.mxu0 0
    %581 = vmatprep.mubr.bf16.mxu0 0
    %582 = vmatmul.mubr.bf16.gmra.mrb[0].mxu0 %v377
    %v583 = vpop.f32.mrb[0].mxu0
    %v584 = vadd.f32 %v106, %v583
    %v585 = vpop.f32.mrb[0].mxu0
    %v586 = vadd.f32 %v110, %v585
    %v587 = vpop.f32.mrb[0].mxu0
    %v588 = vadd.f32 %v106, %v587
    %v589 = vpop.f32.mrb[0].mxu0
    %v590 = vadd.f32 %v110, %v589
    %591 = vmatprep.mubr.bf16.mxu0 0
    %592 = vmatmul.mubr.bf16.gmra.mrb[0].mxu0 %v380
    %v593 = vpop.f32.mrb[0].mxu0
    %v594 = vadd.f32 %v106, %v593
    %v595 = vpop.f32.mrb[0].mxu0
    %v596 = vadd.f32 %v110, %v595
    %v597 = vpop.f32.mrb[0].mxu0
    %v598 = vadd.f32 %v106, %v597
    %v599 = vpop.f32.mrb[0].mxu0
    %v600 = vadd.f32 %v110, %v599
    %601 = vmatprep.mubr.bf16.mxu0 0
    %602 = vmatmul.mubr.bf16.gmra.mrb[0].mxu0 %v383
    %v603 = vpop.f32.mrb[0].mxu0
    %v604 = vadd.f32 %v106, %v603
    %v605 = vpop.f32.mrb[0].mxu0
    %v606 = vadd.f32 %v110, %v605
    %v607 = vpop.f32.mrb[0].mxu0
    %v608 = vadd.f32 %v106, %v607
    %v609 = vpop.f32.mrb[0].mxu0
    %v610 = vadd.f32 %v110, %v609
    %611 = vmatprep.mubr.bf16.mxu0 0
    %612 = vmatmul.mubr.bf16.gmra.mrb[0].mxu0 %v386
    %v613 = vpop.f32.mrb[0].mxu0
    %v614 = vadd.f32 %v106, %v613
    %v615 = vpop.f32.mrb[0].mxu0
    %v616 = vadd.f32 %v110, %v615
    %v617 = vpop.f32.mrb[0].mxu0
    %v618 = vadd.f32 %v106, %v617
    %v619 = vpop.f32.mrb[0].mxu0
    %v620 = vadd.f32 %v110, %v619
    %621 = vmatprep.mubr.bf16.mxu0 0
    %622 = vmatmul.mubr.bf16.gmra.mrb[0].mxu0 %v389
    %v623 = vpop.f32.mrb[0].mxu0
    %v624 = vadd.f32 %v106, %v623
    %v625 = vpop.f32.mrb[0].mxu0
    %v626 = vadd.f32 %v110, %v625
    %v627 = vpop.f32.mrb[0].mxu0
    %v628 = vadd.f32 %v106, %v627
    %v629 = vpop.f32.mrb[0].mxu0
    %v630 = vadd.f32 %v110, %v629
    %631 = vmatprep.mubr.bf16.mxu0 0
    %632 = vmatmul.mubr.bf16.gmra.mrb[0].mxu0 %v392
    %v633 = vpop.f32.mrb[0].mxu0
    %v634 = vadd.f32 %v106, %v633
    %v635 = vpop.f32.mrb[0].mxu0
    %v636 = vadd.f32 %v110, %v635
    %v637 = vpop.f32.mrb[0].mxu0
    %v638 = vadd.f32 %v106, %v637
    %v639 = vpop.f32.mrb[0].mxu0
    %v640 = vadd.f32 %v110, %v639
    %641 = vmatprep.mubr.bf16.mxu0 0
    %642 = vmatmul.mubr.bf16.gmra.mrb[0].mxu0 %v395
    %v643 = vpop.f32.mrb[0].mxu0
    %v644 = vadd.f32 %v106, %v643
    %v645 = vpop.f32.mrb[0].mxu0
    %v646 = vadd.f32 %v110, %v645
    %v647 = vpop.f32.mrb[0].mxu0
    %v648 = vadd.f32 %v106, %v647
    %v649 = vpop.f32.mrb[0].mxu0
    %v650 = vadd.f32 %v110, %v649
    %651 = vdwg.mxu0
    %652 = vmatprep.subr.bf16.mxu0 %v300
    %653 = vmatpush1.bf16.msra.mxu0 %v299
    %654 = vmatprep.subr.bf16.mxu0 %v316
    %655 = vmatpush1.bf16.msra.mxu0 %v315
    %656 = vmatprep.subr.bf16.mxu0 %v414
    %657 = vmatpush1.bf16.msra.mxu0 %v411
    %658 = vmatprep.subr.bf16.mxu0 0
    %659 = vmatpush1.bf16.msra.mxu0 0
    %660 = vmatprep.subr.bf16.mxu0 0
    %661 = vmatpush1.bf16.msra.mxu0 0
    %662 = vmatprep.subr.bf16.mxu0 0
    %663 = vmatpush1.bf16.msra.mxu0 0
    %664 = vmatprep.subr.bf16.mxu0 0
    %665 = vmatpush1.bf16.msra.mxu0 0
    %666 = vmatprep.subr.bf16.mxu0 0
    %667 = vmatpush1.bf16.msra.mxu0 0
    %668 = vmatprep.subr.bf16.mxu0 0
    %669 = vmatpush1.bf16.msra.mxu0 0
    %670 = vmatprep.subr.bf16.mxu0 0
    %671 = vmatpush1.bf16.msra.mxu0 0
    %672 = vmatprep.subr.bf16.mxu0 0
    %673 = vmatpush1.bf16.msra.mxu0 0
    %674 = vmatprep.subr.bf16.mxu0 0
    %675 = vmatpush1.bf16.msra.mxu0 0
    %676 = vmatprep.subr.bf16.mxu0 0
    %677 = vmatpush1.bf16.msra.mxu0 0
    %678 = vmatprep.subr.bf16.mxu0 0
    %679 = vmatpush1.bf16.msra.mxu0 0
    %680 = vmatprep.subr.bf16.mxu0 0
    %681 = vmatpush1.bf16.msra.mxu0 0
    %682 = vmatprep.subr.bf16.mxu0 0
    %683 = vmatpush1.bf16.msra.mxu0 0
    %684 = vmatprep.mubr.bf16.mxu0 0
    %685 = vmatmul.mubr.bf16.gmra.mrb[0].mxu0 %v377
    %v686 = vpop.f32.mrb[0].mxu0
    %v687 = vadd.f32 %v114, %v686
    %v688 = vpop.f32.mrb[0].mxu0
    %v689 = vadd.f32 %v118, %v688
    %v690 = vpop.f32.mrb[0].mxu0
    %v691 = vadd.f32 %v114, %v690
    %v692 = vpop.f32.mrb[0].mxu0
    %v693 = vadd.f32 %v118, %v692
    %694 = vmatprep.mubr.bf16.mxu0 0
    %695 = vmatmul.mubr.bf16.gmra.mrb[0].mxu0 %v380
    %v696 = vpop.f32.mrb[0].mxu0
    %v697 = vadd.f32 %v114, %v696
    %v698 = vpop.f32.mrb[0].mxu0
    %v699 = vadd.f32 %v118, %v698
    %v700 = vpop.f32.mrb[0].mxu0
    %v701 = vadd.f32 %v114, %v700
    %v702 = vpop.f32.mrb[0].mxu0
    %v703 = vadd.f32 %v118, %v702
    %704 = vmatprep.mubr.bf16.mxu0 0
    %705 = vmatmul.mubr.bf16.gmra.mrb[0].mxu0 %v383
    %v706 = vpop.f32.mrb[0].mxu0
    %v707 = vadd.f32 %v114, %v706
    %v708 = vpop.f32.mrb[0].mxu0
    %v709 = vadd.f32 %v118, %v708
    %v710 = vpop.f32.mrb[0].mxu0
    %v711 = vadd.f32 %v114, %v710
    %v712 = vpop.f32.mrb[0].mxu0
    %v713 = vadd.f32 %v118, %v712
    %714 = vmatprep.mubr.bf16.mxu0 0
    %715 = vmatmul.mubr.bf16.gmra.mrb[0].mxu0 %v386
    %v716 = vpop.f32.mrb[0].mxu0
    %v717 = vadd.f32 %v114, %v716
    %v718 = vpop.f32.mrb[0].mxu0
    %v719 = vadd.f32 %v118, %v718
    %v720 = vpop.f32.mrb[0].mxu0
    %v721 = vadd.f32 %v114, %v720
    %v722 = vpop.f32.mrb[0].mxu0
    %v723 = vadd.f32 %v118, %v722
    %724 = vmatprep.mubr.bf16.mxu0 0
    %725 = vmatmul.mubr.bf16.gmra.mrb[0].mxu0 %v389
    %v726 = vpop.f32.mrb[0].mxu0
    %v727 = vadd.f32 %v114, %v726
    %v728 = vpop.f32.mrb[0].mxu0
    %v729 = vadd.f32 %v118, %v728
    %v730 = vpop.f32.mrb[0].mxu0
    %v731 = vadd.f32 %v114, %v730
    %v732 = vpop.f32.mrb[0].mxu0
    %v733 = vadd.f32 %v118, %v732
    %734 = vmatprep.mubr.bf16.mxu0 0
    %735 = vmatmul.mubr.bf16.gmra.mrb[0].mxu0 %v392
    %v736 = vpop.f32.mrb[0].mxu0
    %v737 = vadd.f32 %v114, %v736
    %v738 = vpop.f32.mrb[0].mxu0
    %v739 = vadd.f32 %v118, %v738
    %v740 = vpop.f32.mrb[0].mxu0
    %v741 = vadd.f32 %v114, %v740
    %v742 = vpop.f32.mrb[0].mxu0
    %v743 = vadd.f32 %v118, %v742
    %744 = vmatprep.mubr.bf16.mxu0 0
    %745 = vmatmul.mubr.bf16.gmra.mrb[0].mxu0 %v395
    %v746 = vpop.f32.mrb[0].mxu0
    %v747 = vadd.f32 %v114, %v746
    %v748 = vpop.f32.mrb[0].mxu0
    %v749 = vadd.f32 %v118, %v748
    %v750 = vpop.f32.mrb[0].mxu0
    %v751 = vadd.f32 %v114, %v750
    %v752 = vpop.f32.mrb[0].mxu0
    %v753 = vadd.f32 %v118, %v752
    %754 = vdwg.mxu0
    %755 = vmatprep.subr.bf16.mxu0 %v302
    %756 = vmatpush1.bf16.msra.mxu0 %v301
    %757 = vmatprep.subr.bf16.mxu0 %v318
    %758 = vmatpush1.bf16.msra.mxu0 %v317
    %759 = vmatprep.subr.bf16.mxu0 %v420
    %760 = vmatpush1.bf16.msra.mxu0 %v417
    %761 = vmatprep.subr.bf16.mxu0 0
    %762 = vmatpush1.bf16.msra.mxu0 0
    %763 = vmatprep.subr.bf16.mxu0 0
    %764 = vmatpush1.bf16.msra.mxu0 0
    %765 = vmatprep.subr.bf16.mxu0 0
    %766 = vmatpush1.bf16.msra.mxu0 0
    %767 = vmatprep.subr.bf16.mxu0 0
    %768 = vmatpush1.bf16.msra.mxu0 0
    %769 = vmatprep.subr.bf16.mxu0 0
    %770 = vmatpush1.bf16.msra.mxu0 0
    %771 = vmatprep.subr.bf16.mxu0 0
    %772 = vmatpush1.bf16.msra.mxu0 0
    %773 = vmatprep.subr.bf16.mxu0 0
    %774 = vmatpush1.bf16.msra.mxu0 0
    %775 = vmatprep.subr.bf16.mxu0 0
    %776 = vmatpush1.bf16.msra.mxu0 0
    %777 = vmatprep.subr.bf16.mxu0 0
    %778 = vmatpush1.bf16.msra.mxu0 0
    %779 = vmatprep.subr.bf16.mxu0 0
    %780 = vmatpush1.bf16.msra.mxu0 0
    %781 = vmatprep.subr.bf16.mxu0 0
    %782 = vmatpush1.bf16.msra.mxu0 0
    %783 = vmatprep.subr.bf16.mxu0 0
    %784 = vmatpush1.bf16.msra.mxu0 0
    %785 = vmatprep.subr.bf16.mxu0 0
    %786 = vmatpush1.bf16.msra.mxu0 0
    %787 = vmatprep.mubr.bf16.mxu0 0
    %788 = vmatmul.mubr.bf16.gmra.mrb[0].mxu0 %v377
    %v789 = vpop.f32.mrb[0].mxu0
    %v790 = vadd.f32 %v122, %v789
    %v791 = vpop.f32.mrb[0].mxu0
    %v792 = vadd.f32 %v126, %v791
    %v793 = vpop.f32.mrb[0].mxu0
    %v794 = vadd.f32 %v122, %v793
    %v795 = vpop.f32.mrb[0].mxu0
    %v796 = vadd.f32 %v126, %v795
    %797 = vmatprep.mubr.bf16.mxu0 0
    %798 = vmatmul.mubr.bf16.gmra.mrb[0].mxu0 %v380
    %v799 = vpop.f32.mrb[0].mxu0
    %v800 = vadd.f32 %v122, %v799
    %v801 = vpop.f32.mrb[0].mxu0
    %v802 = vadd.f32 %v126, %v801
    %v803 = vpop.f32.mrb[0].mxu0
    %v804 = vadd.f32 %v122, %v803
    %v805 = vpop.f32.mrb[0].mxu0
    %v806 = vadd.f32 %v126, %v805
    %807 = vmatprep.mubr.bf16.mxu0 0
    %808 = vmatmul.mubr.bf16.gmra.mrb[0].mxu0 %v383
    %v809 = vpop.f32.mrb[0].mxu0
    %v810 = vadd.f32 %v122, %v809
    %v811 = vpop.f32.mrb[0].mxu0
    %v812 = vadd.f32 %v126, %v811
    %v813 = vpop.f32.mrb[0].mxu0
    %v814 = vadd.f32 %v122, %v813
    %v815 = vpop.f32.mrb[0].mxu0
    %v816 = vadd.f32 %v126, %v815
    %817 = vmatprep.mubr.bf16.mxu0 0
    %818 = vmatmul.mubr.bf16.gmra.mrb[0].mxu0 %v386
    %v819 = vpop.f32.mrb[0].mxu0
    %v820 = vadd.f32 %v122, %v819
    %v821 = vpop.f32.mrb[0].mxu0
    %v822 = vadd.f32 %v126, %v821
    %v823 = vpop.f32.mrb[0].mxu0
    %v824 = vadd.f32 %v122, %v823
    %v825 = vpop.f32.mrb[0].mxu0
    %v826 = vadd.f32 %v126, %v825
    %827 = vmatprep.mubr.bf16.mxu0 0
    %828 = vmatmul.mubr.bf16.gmra.mrb[0].mxu0 %v389
    %v829 = vpop.f32.mrb[0].mxu0
    %v830 = vadd.f32 %v122, %v829
    %v831 = vpop.f32.mrb[0].mxu0
    %v832 = vadd.f32 %v126, %v831
    %v833 = vpop.f32.mrb[0].mxu0
    %v834 = vadd.f32 %v122, %v833
    %v835 = vpop.f32.mrb[0].mxu0
    %v836 = vadd.f32 %v126, %v835
    %837 = vmatprep.mubr.bf16.mxu0 0
    %838 = vmatmul.mubr.bf16.gmra.mrb[0].mxu0 %v392
    %v839 = vpop.f32.mrb[0].mxu0
    %v840 = vadd.f32 %v122, %v839
    %v841 = vpop.f32.mrb[0].mxu0
    %v842 = vadd.f32 %v126, %v841
    %v843 = vpop.f32.mrb[0].mxu0
    %v844 = vadd.f32 %v122, %v843
    %v845 = vpop.f32.mrb[0].mxu0
    %v846 = vadd.f32 %v126, %v845
    %847 = vmatprep.mubr.bf16.mxu0 0
    %848 = vmatmul.mubr.bf16.gmra.mrb[0].mxu0 %v395
    %v849 = vpop.f32.mrb[0].mxu0
    %v850 = vadd.f32 %v122, %v849
    %v851 = vpop.f32.mrb[0].mxu0
    %v852 = vadd.f32 %v126, %v851
    %v853 = vpop.f32.mrb[0].mxu0
    %v854 = vadd.f32 %v122, %v853
    %v855 = vpop.f32.mrb[0].mxu0
    %v856 = vadd.f32 %v126, %v855
    %857 = vdwg.mxu0
    %858 = vmatprep.subr.bf16.mxu0 %v304
    %859 = vmatpush1.bf16.msra.mxu0 %v303
    %860 = vmatprep.subr.bf16.mxu0 %v320
    %861 = vmatpush1.bf16.msra.mxu0 %v319
    %862 = vmatprep.subr.bf16.mxu0 %v426
    %863 = vmatpush1.bf16.msra.mxu0 %v423
    %864 = vmatprep.subr.bf16.mxu0 0
    %865 = vmatpush1.bf16.msra.mxu0 0
    %866 = vmatprep.subr.bf16.mxu0 0
    %867 = vmatpush1.bf16.msra.mxu0 0
    %868 = vmatprep.subr.bf16.mxu0 0
    %869 = vmatpush1.bf16.msra.mxu0 0
    %870 = vmatprep.subr.bf16.mxu0 0
    %871 = vmatpush1.bf16.msra.mxu0 0
    %872 = vmatprep.subr.bf16.mxu0 0
    %873 = vmatpush1.bf16.msra.mxu0 0
    %874 = vmatprep.subr.bf16.mxu0 0
    %875 = vmatpush1.bf16.msra.mxu0 0
    %876 = vmatprep.subr.bf16.mxu0 0
    %877 = vmatpush1.bf16.msra.mxu0 0
    %878 = vmatprep.subr.bf16.mxu0 0
    %879 = vmatpush1.bf16.msra.mxu0 0
    %880 = vmatprep.subr.bf16.mxu0 0
    %881 = vmatpush1.bf16.msra.mxu0 0
    %882 = vmatprep.subr.bf16.mxu0 0
    %883 = vmatpush1.bf16.msra.mxu0 0
    %884 = vmatprep.subr.bf16.mxu0 0
    %885 = vmatpush1.bf16.msra.mxu0 0
    %886 = vmatprep.subr.bf16.mxu0 0
    %887 = vmatpush1.bf16.msra.mxu0 0
    %888 = vmatprep.subr.bf16.mxu0 0
    %889 = vmatpush1.bf16.msra.mxu0 0
    %890 = vmatprep.mubr.bf16.mxu0 0
    %891 = vmatmul.mubr.bf16.gmra.mrb[0].mxu0 %v377
    %v892 = vpop.f32.mrb[0].mxu0
    %v893 = vadd.f32 %v130, %v892
    %v894 = vpop.f32.mrb[0].mxu0
    %v895 = vadd.f32 %v134, %v894
    %v896 = vpop.f32.mrb[0].mxu0
    %v897 = vadd.f32 %v130, %v896
    %v898 = vpop.f32.mrb[0].mxu0
    %v899 = vadd.f32 %v134, %v898
    %900 = vmatprep.mubr.bf16.mxu0 0
    %901 = vmatmul.mubr.bf16.gmra.mrb[0].mxu0 %v380
    %v902 = vpop.f32.mrb[0].mxu0
    %v903 = vadd.f32 %v130, %v902
    %v904 = vpop.f32.mrb[0].mxu0
    %v905 = vadd.f32 %v134, %v904
    %v906 = vpop.f32.mrb[0].mxu0
    %v907 = vadd.f32 %v130, %v906
    %v908 = vpop.f32.mrb[0].mxu0
    %v909 = vadd.f32 %v134, %v908
    %910 = vmatprep.mubr.bf16.mxu0 0
    %911 = vmatmul.mubr.bf16.gmra.mrb[0].mxu0 %v383
    %v912 = vpop.f32.mrb[0].mxu0
    %v913 = vadd.f32 %v130, %v912
    %v914 = vpop.f32.mrb[0].mxu0
    %v915 = vadd.f32 %v134, %v914
    %v916 = vpop.f32.mrb[0].mxu0
    %v917 = vadd.f32 %v130, %v916
    %v918 = vpop.f32.mrb[0].mxu0
    %v919 = vadd.f32 %v134, %v918
    %920 = vmatprep.mubr.bf16.mxu0 0
    %921 = vmatmul.mubr.bf16.gmra.mrb[0].mxu0 %v386
    %v922 = vpop.f32.mrb[0].mxu0
    %v923 = vadd.f32 %v130, %v922
    %v924 = vpop.f32.mrb[0].mxu0
    %v925 = vadd.f32 %v134, %v924
    %v926 = vpop.f32.mrb[0].mxu0
    %v927 = vadd.f32 %v130, %v926
    %v928 = vpop.f32.mrb[0].mxu0
    %v929 = vadd.f32 %v134, %v928
    %930 = vmatprep.mubr.bf16.mxu0 0
    %931 = vmatmul.mubr.bf16.gmra.mrb[0].mxu0 %v389
    %v932 = vpop.f32.mrb[0].mxu0
    %v933 = vadd.f32 %v130, %v932
    %v934 = vpop.f32.mrb[0].mxu0
    %v935 = vadd.f32 %v134, %v934
    %v936 = vpop.f32.mrb[0].mxu0
    %v937 = vadd.f32 %v130, %v936
    %v938 = vpop.f32.mrb[0].mxu0
    %v939 = vadd.f32 %v134, %v938
    %940 = vmatprep.mubr.bf16.mxu0 0
    %941 = vmatmul.mubr.bf16.gmra.mrb[0].mxu0 %v392
    %v942 = vpop.f32.mrb[0].mxu0
    %v943 = vadd.f32 %v130, %v942
    %v944 = vpop.f32.mrb[0].mxu0
    %v945 = vadd.f32 %v134, %v944
    %v946 = vpop.f32.mrb[0].mxu0
    %v947 = vadd.f32 %v130, %v946
    %v948 = vpop.f32.mrb[0].mxu0
    %v949 = vadd.f32 %v134, %v948
    %950 = vmatprep.mubr.bf16.mxu0 0
    %951 = vmatmul.mubr.bf16.gmra.mrb[0].mxu0 %v395
    %v952 = vpop.f32.mrb[0].mxu0
    %v953 = vadd.f32 %v130, %v952
    %v954 = vpop.f32.mrb[0].mxu0
    %v955 = vadd.f32 %v134, %v954
    %v956 = vpop.f32.mrb[0].mxu0
    %v957 = vadd.f32 %v130, %v956
    %v958 = vpop.f32.mrb[0].mxu0
    %v959 = vadd.f32 %v134, %v958
    %960 = vdwg.mxu0
    %961 = vmatprep.subr.bf16.mxu0 %v306
    %962 = vmatpush1.bf16.msra.mxu0 %v305
    %963 = vmatprep.subr.bf16.mxu0 %v322
    %964 = vmatpush1.bf16.msra.mxu0 %v321
    %965 = vmatprep.subr.bf16.mxu0 %v432
    %966 = vmatpush1.bf16.msra.mxu0 %v429
    %967 = vmatprep.subr.bf16.mxu0 0
    %968 = vmatpush1.bf16.msra.mxu0 0
    %969 = vmatprep.subr.bf16.mxu0 0
    %970 = vmatpush1.bf16.msra.mxu0 0
    %971 = vmatprep.subr.bf16.mxu0 0
    %972 = vmatpush1.bf16.msra.mxu0 0
    %973 = vmatprep.subr.bf16.mxu0 0
    %974 = vmatpush1.bf16.msra.mxu0 0
    %975 = vmatprep.subr.bf16.mxu0 0
    %976 = vmatpush1.bf16.msra.mxu0 0
    %977 = vmatprep.subr.bf16.mxu0 0
    %978 = vmatpush1.bf16.msra.mxu0 0
    %979 = vmatprep.subr.bf16.mxu0 0
    %980 = vmatpush1.bf16.msra.mxu0 0
    %981 = vmatprep.subr.bf16.mxu0 0
    %982 = vmatpush1.bf16.msra.mxu0 0
    %983 = vmatprep.subr.bf16.mxu0 0
    %984 = vmatpush1.bf16.msra.mxu0 0
    %985 = vmatprep.subr.bf16.mxu0 0
    %986 = vmatpush1.bf16.msra.mxu0 0
    %987 = vmatprep.subr.bf16.mxu0 0
    %988 = vmatpush1.bf16.msra.mxu0 0
    %989 = vmatprep.subr.bf16.mxu0 0
    %990 = vmatpush1.bf16.msra.mxu0 0
    %991 = vmatprep.subr.bf16.mxu0 0
    %992 = vmatpush1.bf16.msra.mxu0 0
    %993 = vmatprep.mubr.bf16.mxu0 0
    %994 = vmatmul.mubr.bf16.gmra.mrb[0].mxu0 %v377
    %v995 = vpop.f32.mrb[0].mxu0
    %v996 = vadd.f32 %v138, %v995
    %v997 = vpop.f32.mrb[0].mxu0
    %v998 = vadd.f32 %v142, %v997
    %v999 = vpop.f32.mrb[0].mxu0
    %v1000 = vadd.f32 %v138, %v999
    %v1001 = vpop.f32.mrb[0].mxu0
    %v1002 = vadd.f32 %v142, %v1001
    %1003 = vmatprep.mubr.bf16.mxu0 0
    %1004 = vmatmul.mubr.bf16.gmra.mrb[0].mxu0 %v380
    %v1005 = vpop.f32.mrb[0].mxu0
    %v1006 = vadd.f32 %v138, %v1005
    %v1007 = vpop.f32.mrb[0].mxu0
    %v1008 = vadd.f32 %v142, %v1007
    %v1009 = vpop.f32.mrb[0].mxu0
    %v1010 = vadd.f32 %v138, %v1009
    %v1011 = vpop.f32.mrb[0].mxu0
    %v1012 = vadd.f32 %v142, %v1011
    %1013 = vmatprep.mubr.bf16.mxu0 0
    %1014 = vmatmul.mubr.bf16.gmra.mrb[0].mxu0 %v383
    %v1015 = vpop.f32.mrb[0].mxu0
    %v1016 = vadd.f32 %v138, %v1015
    %v1017 = vpop.f32.mrb[0].mxu0
    %v1018 = vadd.f32 %v142, %v1017
    %v1019 = vpop.f32.mrb[0].mxu0
    %v1020 = vadd.f32 %v138, %v1019
    %v1021 = vpop.f32.mrb[0].mxu0
    %v1022 = vadd.f32 %v142, %v1021
    %1023 = vmatprep.mubr.bf16.mxu0 0
    %1024 = vmatmul.mubr.bf16.gmra.mrb[0].mxu0 %v386
    %v1025 = vpop.f32.mrb[0].mxu0
    %v1026 = vadd.f32 %v138, %v1025
    %v1027 = vpop.f32.mrb[0].mxu0
    %v1028 = vadd.f32 %v142, %v1027
    %v1029 = vpop.f32.mrb[0].mxu0
    %v1030 = vadd.f32 %v138, %v1029
    %v1031 = vpop.f32.mrb[0].mxu0
    %v1032 = vadd.f32 %v142, %v1031
    %1033 = vmatprep.mubr.bf16.mxu0 0
    %1034 = vmatmul.mubr.bf16.gmra.mrb[0].mxu0 %v389
    %v1035 = vpop.f32.mrb[0].mxu0
    %v1036 = vadd.f32 %v138, %v1035
    %v1037 = vpop.f32.mrb[0].mxu0
    %v1038 = vadd.f32 %v142, %v1037
    %v1039 = vpop.f32.mrb[0].mxu0
    %v1040 = vadd.f32 %v138, %v1039
    %v1041 = vpop.f32.mrb[0].mxu0
    %v1042 = vadd.f32 %v142, %v1041
    %1043 = vmatprep.mubr.bf16.mxu0 0
    %1044 = vmatmul.mubr.bf16.gmra.mrb[0].mxu0 %v392
    %v1045 = vpop.f32.mrb[0].mxu0
    %v1046 = vadd.f32 %v138, %v1045
    %v1047 = vpop.f32.mrb[0].mxu0
    %v1048 = vadd.f32 %v142, %v1047
    %v1049 = vpop.f32.mrb[0].mxu0
    %v1050 = vadd.f32 %v138, %v1049
    %v1051 = vpop.f32.mrb[0].mxu0
    %v1052 = vadd.f32 %v142, %v1051
    %1053 = vmatprep.mubr.bf16.mxu0 0
    %1054 = vmatmul.mubr.bf16.gmra.mrb[0].mxu0 %v395
    %v1055 = vpop.f32.mrb[0].mxu0
    %v1056 = vadd.f32 %v138, %v1055
    %v1057 = vpop.f32.mrb[0].mxu0
    %v1058 = vadd.f32 %v142, %v1057
    %v1059 = vpop.f32.mrb[0].mxu0
    %v1060 = vadd.f32 %v138, %v1059
    %v1061 = vpop.f32.mrb[0].mxu0
    %v1062 = vadd.f32 %v142, %v1061
    %1063 = vdwg.mxu0
    %1064 = vmatprep.subr.bf16.mxu0 %v308
    %1065 = vmatpush1.bf16.msra.mxu0 %v307
    %1066 = vmatprep.subr.bf16.mxu0 %v324
    %1067 = vmatpush1.bf16.msra.mxu0 %v323
    %1068 = vmatprep.subr.bf16.mxu0 %v438
    %1069 = vmatpush1.bf16.msra.mxu0 %v435
    %1070 = vmatprep.subr.bf16.mxu0 0
    %1071 = vmatpush1.bf16.msra.mxu0 0
    %1072 = vmatprep.subr.bf16.mxu0 0
    %1073 = vmatpush1.bf16.msra.mxu0 0
    %1074 = vmatprep.subr.bf16.mxu0 0
    %1075 = vmatpush1.bf16.msra.mxu0 0
    %1076 = vmatprep.subr.bf16.mxu0 0
    %1077 = vmatpush1.bf16.msra.mxu0 0
    %1078 = vmatprep.subr.bf16.mxu0 0
    %1079 = vmatpush1.bf16.msra.mxu0 0
    %1080 = vmatprep.subr.bf16.mxu0 0
    %1081 = vmatpush1.bf16.msra.mxu0 0
    %1082 = vmatprep.subr.bf16.mxu0 0
    %1083 = vmatpush1.bf16.msra.mxu0 0
    %1084 = vmatprep.subr.bf16.mxu0 0
    %1085 = vmatpush1.bf16.msra.mxu0 0
    %1086 = vmatprep.subr.bf16.mxu0 0
    %1087 = vmatpush1.bf16.msra.mxu0 0
    %1088 = vmatprep.subr.bf16.mxu0 0
    %1089 = vmatpush1.bf16.msra.mxu0 0
    %1090 = vmatprep.subr.bf16.mxu0 0
    %1091 = vmatpush1.bf16.msra.mxu0 0
    %1092 = vmatprep.subr.bf16.mxu0 0
    %1093 = vmatpush1.bf16.msra.mxu0 0
    %1094 = vmatprep.subr.bf16.mxu0 0
    %1095 = vmatpush1.bf16.msra.mxu0 0
    %1096 = vmatprep.mubr.bf16.mxu0 0
    %1097 = vmatmul.mubr.bf16.gmra.mrb[0].mxu0 %v377
    %v1098 = vpop.f32.mrb[0].mxu0
    %v1099 = vadd.f32 %v146, %v1098
    %v1100 = vpop.f32.mrb[0].mxu0
    %v1101 = vadd.f32 %v150, %v1100
    %v1102 = vpop.f32.mrb[0].mxu0
    %v1103 = vadd.f32 %v146, %v1102
    %v1104 = vpop.f32.mrb[0].mxu0
    %v1105 = vadd.f32 %v150, %v1104
    %1106 = vmatprep.mubr.bf16.mxu0 0
    %1107 = vmatmul.mubr.bf16.gmra.mrb[0].mxu0 %v380
    %v1108 = vpop.f32.mrb[0].mxu0
    %v1109 = vadd.f32 %v146, %v1108
    %v1110 = vpop.f32.mrb[0].mxu0
    %v1111 = vadd.f32 %v150, %v1110
    %v1112 = vpop.f32.mrb[0].mxu0
    %v1113 = vadd.f32 %v146, %v1112
    %v1114 = vpop.f32.mrb[0].mxu0
    %v1115 = vadd.f32 %v150, %v1114
    %1116 = vmatprep.mubr.bf16.mxu0 0
    %1117 = vmatmul.mubr.bf16.gmra.mrb[0].mxu0 %v383
    %v1118 = vpop.f32.mrb[0].mxu0
    %v1119 = vadd.f32 %v146, %v1118
    %v1120 = vpop.f32.mrb[0].mxu0
    %v1121 = vadd.f32 %v150, %v1120
    %v1122 = vpop.f32.mrb[0].mxu0
    %v1123 = vadd.f32 %v146, %v1122
    %v1124 = vpop.f32.mrb[0].mxu0
    %v1125 = vadd.f32 %v150, %v1124
    %1126 = vmatprep.mubr.bf16.mxu0 0
    %1127 = vmatmul.mubr.bf16.gmra.mrb[0].mxu0 %v386
    %v1128 = vpop.f32.mrb[0].mxu0
    %v1129 = vadd.f32 %v146, %v1128
    %v1130 = vpop.f32.mrb[0].mxu0
    %v1131 = vadd.f32 %v150, %v1130
    %v1132 = vpop.f32.mrb[0].mxu0
    %v1133 = vadd.f32 %v146, %v1132
    %v1134 = vpop.f32.mrb[0].mxu0
    %v1135 = vadd.f32 %v150, %v1134
    %1136 = vmatprep.mubr.bf16.mxu0 0
    %1137 = vmatmul.mubr.bf16.gmra.mrb[0].mxu0 %v389
    %v1138 = vpop.f32.mrb[0].mxu0
    %v1139 = vadd.f32 %v146, %v1138
    %v1140 = vpop.f32.mrb[0].mxu0
    %v1141 = vadd.f32 %v150, %v1140
    %v1142 = vpop.f32.mrb[0].mxu0
    %v1143 = vadd.f32 %v146, %v1142
    %v1144 = vpop.f32.mrb[0].mxu0
    %v1145 = vadd.f32 %v150, %v1144
    %1146 = vmatprep.mubr.bf16.mxu0 0
    %1147 = vmatmul.mubr.bf16.gmra.mrb[0].mxu0 %v392
    %v1148 = vpop.f32.mrb[0].mxu0
    %v1149 = vadd.f32 %v146, %v1148
    %v1150 = vpop.f32.mrb[0].mxu0
    %v1151 = vadd.f32 %v150, %v1150
    %v1152 = vpop.f32.mrb[0].mxu0
    %v1153 = vadd.f32 %v146, %v1152
    %v1154 = vpop.f32.mrb[0].mxu0
    %v1155 = vadd.f32 %v150, %v1154
    %1156 = vmatprep.mubr.bf16.mxu0 0
    %1157 = vmatmul.mubr.bf16.gmra.mrb[0].mxu0 %v395
    %v1158 = vpop.f32.mrb[0].mxu0
    %v1159 = vadd.f32 %v146, %v1158
    %v1160 = vpop.f32.mrb[0].mxu0
    %v1161 = vadd.f32 %v150, %v1160
    %v1162 = vpop.f32.mrb[0].mxu0
    %v1163 = vadd.f32 %v146, %v1162
    %v1164 = vpop.f32.mrb[0].mxu0
    %v1165 = vadd.f32 %v150, %v1164
    %1166 = vdwg.mxu0
    %1167 = vmatprep.subr.bf16.mxu0 %v310
    %1168 = vmatpush1.bf16.msra.mxu0 %v309
    %1169 = vmatprep.subr.bf16.mxu0 %v326
    %1170 = vmatpush1.bf16.msra.mxu0 %v325
    %1171 = vmatprep.subr.bf16.mxu0 %v444
    %1172 = vmatpush1.bf16.msra.mxu0 %v441
    %1173 = vmatprep.subr.bf16.mxu0 0
    %1174 = vmatpush1.bf16.msra.mxu0 0
    %1175 = vmatprep.subr.bf16.mxu0 0
    %1176 = vmatpush1.bf16.msra.mxu0 0
    %1177 = vmatprep.subr.bf16.mxu0 0
    %1178 = vmatpush1.bf16.msra.mxu0 0
    %1179 = vmatprep.subr.bf16.mxu0 0
    %1180 = vmatpush1.bf16.msra.mxu0 0
    %1181 = vmatprep.subr.bf16.mxu0 0
    %1182 = vmatpush1.bf16.msra.mxu0 0
    %1183 = vmatprep.subr.bf16.mxu0 0
    %1184 = vmatpush1.bf16.msra.mxu0 0
    %1185 = vmatprep.subr.bf16.mxu0 0
    %1186 = vmatpush1.bf16.msra.mxu0 0
    %1187 = vmatprep.subr.bf16.mxu0 0
    %1188 = vmatpush1.bf16.msra.mxu0 0
    %1189 = vmatprep.subr.bf16.mxu0 0
    %1190 = vmatpush1.bf16.msra.mxu0 0
    %1191 = vmatprep.subr.bf16.mxu0 0
    %1192 = vmatpush1.bf16.msra.mxu0 0
    %1193 = vmatprep.subr.bf16.mxu0 0
    %1194 = vmatpush1.bf16.msra.mxu0 0
    %1195 = vmatprep.subr.bf16.mxu0 0
    %1196 = vmatpush1.bf16.msra.mxu0 0
    %1197 = vmatprep.subr.bf16.mxu0 0
    %1198 = vmatpush1.bf16.msra.mxu0 0
    %1199 = vmatprep.mubr.bf16.mxu0 0
    %1200 = vmatmul.mubr.bf16.gmra.mrb[0].mxu0 %v377
    %v1201 = vpop.f32.mrb[0].mxu0
    %v1202 = vadd.f32 %v154, %v1201
    %v1203 = vpop.f32.mrb[0].mxu0
    %v1204 = vadd.f32 %v158, %v1203
    %v1205 = vpop.f32.mrb[0].mxu0
    %v1206 = vadd.f32 %v154, %v1205
    %v1207 = vpop.f32.mrb[0].mxu0
    %v1208 = vadd.f32 %v158, %v1207
    %1209 = vmatprep.mubr.bf16.mxu0 0
    %1210 = vmatmul.mubr.bf16.gmra.mrb[0].mxu0 %v380
    %v1211 = vpop.f32.mrb[0].mxu0
    %v1212 = vadd.f32 %v154, %v1211
    %v1213 = vpop.f32.mrb[0].mxu0
    %v1214 = vadd.f32 %v158, %v1213
    %v1215 = vpop.f32.mrb[0].mxu0
    %v1216 = vadd.f32 %v154, %v1215
    %v1217 = vpop.f32.mrb[0].mxu0
    %v1218 = vadd.f32 %v158, %v1217
    %1219 = vmatprep.mubr.bf16.mxu0 0
    %1220 = vmatmul.mubr.bf16.gmra.mrb[0].mxu0 %v383
    %v1221 = vpop.f32.mrb[0].mxu0
    %v1222 = vadd.f32 %v154, %v1221
    %v1223 = vpop.f32.mrb[0].mxu0
    %v1224 = vadd.f32 %v158, %v1223
    %v1225 = vpop.f32.mrb[0].mxu0
    %v1226 = vadd.f32 %v154, %v1225
    %v1227 = vpop.f32.mrb[0].mxu0
    %v1228 = vadd.f32 %v158, %v1227
    %1229 = vmatprep.mubr.bf16.mxu0 0
    %1230 = vmatmul.mubr.bf16.gmra.mrb[0].mxu0 %v386
    %v1231 = vpop.f32.mrb[0].mxu0
    %v1232 = vadd.f32 %v154, %v1231
    %v1233 = vpop.f32.mrb[0].mxu0
    %v1234 = vadd.f32 %v158, %v1233
    %v1235 = vpop.f32.mrb[0].mxu0
    %v1236 = vadd.f32 %v154, %v1235
    %v1237 = vpop.f32.mrb[0].mxu0
    %v1238 = vadd.f32 %v158, %v1237
    %1239 = vmatprep.mubr.bf16.mxu0 0
    %1240 = vmatmul.mubr.bf16.gmra.mrb[0].mxu0 %v389
    %v1241 = vpop.f32.mrb[0].mxu0
    %v1242 = vadd.f32 %v154, %v1241
    %v1243 = vpop.f32.mrb[0].mxu0
    %v1244 = vadd.f32 %v158, %v1243
    %v1245 = vpop.f32.mrb[0].mxu0
    %v1246 = vadd.f32 %v154, %v1245
    %v1247 = vpop.f32.mrb[0].mxu0
    %v1248 = vadd.f32 %v158, %v1247
    %1249 = vmatprep.mubr.bf16.mxu0 0
    %1250 = vmatmul.mubr.bf16.gmra.mrb[0].mxu0 %v392
    %v1251 = vpop.f32.mrb[0].mxu0
    %v1252 = vadd.f32 %v154, %v1251
    %v1253 = vpop.f32.mrb[0].mxu0
    %v1254 = vadd.f32 %v158, %v1253
    %v1255 = vpop.f32.mrb[0].mxu0
    %v1256 = vadd.f32 %v154, %v1255
    %v1257 = vpop.f32.mrb[0].mxu0
    %v1258 = vadd.f32 %v158, %v1257
    %1259 = vmatprep.mubr.bf16.mxu0 0
    %1260 = vmatmul.mubr.bf16.gmra.mrb[0].mxu0 %v395
    %v1261 = vpop.f32.mrb[0].mxu0
    %v1262 = vadd.f32 %v154, %v1261
    %v1263 = vpop.f32.mrb[0].mxu0
    %v1264 = vadd.f32 %v158, %v1263
    %v1265 = vpop.f32.mrb[0].mxu0
    %v1266 = vadd.f32 %v154, %v1265
    %v1267 = vpop.f32.mrb[0].mxu0
    %v1268 = vadd.f32 %v158, %v1267
    %1269 = vdwg.mxu0
    %1270 = vst [vmem:[#allocation5] sm:$0xff] %v481
    %1271 = vst [vmem:[#allocation5 + $0x8] sm:$0xff] %v483
    %1272 = vst [vmem:[#allocation5 + $0x10] sm:$0xff] %v584
    %1273 = vst [vmem:[#allocation5 + $0x18] sm:$0xff] %v586
    %1274 = vst [vmem:[#allocation5 + $0x20] sm:$0xff] %v687
    %1275 = vst [vmem:[#allocation5 + $0x28] sm:$0xff] %v689
    %1276 = vst [vmem:[#allocation5 + $0x30] sm:$0xff] %v790
    %1277 = vst [vmem:[#allocation5 + $0x38] sm:$0xff] %v792
    %1278 = vst [vmem:[#allocation5 + $0x40] sm:$0xff] %v893
    %1279 = vst [vmem:[#allocation5 + $0x48] sm:$0xff] %v895
    %1280 = vst [vmem:[#allocation5 + $0x50] sm:$0xff] %v996
    %1281 = vst [vmem:[#allocation5 + $0x58] sm:$0xff] %v998
    %1282 = vst [vmem:[#allocation5 + $0x60] sm:$0xff] %v1099
    %1283 = vst [vmem:[#allocation5 + $0x68] sm:$0xff] %v1101
    %1284 = vst [vmem:[#allocation5 + $0x70] sm:$0xff] %v1202
    %1285 = vst [vmem:[#allocation5 + $0x78] sm:$0xff] %v1204
    %1286 = vst [vmem:[#allocation5 + $0x80] sm:$0xff] %v485
    %1287 = vst [vmem:[#allocation5 + $0x88] sm:$0xff] %v487
    %1288 = vst [vmem:[#allocation5 + $0x90] sm:$0xff] %v588
    %1289 = vst [vmem:[#allocation5 + $0x98] sm:$0xff] %v590
    %1290 = vst [vmem:[#allocation5 + $0xa0] sm:$0xff] %v691
    %1291 = vst [vmem:[#allocation5 + $0xa8] sm:$0xff] %v693
    %1292 = vst [vmem:[#allocation5 + $0xb0] sm:$0xff] %v794
    %1293 = vst [vmem:[#allocation5 + $0xb8] sm:$0xff] %v796
    %1294 = vst [vmem:[#allocation5 + $0xc0] sm:$0xff] %v897
    %1295 = vst [vmem:[#allocation5 + $0xc8] sm:$0xff] %v899
    %1296 = vst [vmem:[#allocation5 + $0xd0] sm:$0xff] %v1000
    %1297 = vst [vmem:[#allocation5 + $0xd8] sm:$0xff] %v1002
    %1298 = vst [vmem:[#allocation5 + $0xe0] sm:$0xff] %v1103
    %1299 = vst [vmem:[#allocation5 + $0xe8] sm:$0xff] %v1105
    %1300 = vst [vmem:[#allocation5 + $0xf0] sm:$0xff] %v1206
    %1301 = vst [vmem:[#allocation5 + $0xf8] sm:$0xff] %v1208
    %1302 = vst [vmem:[#allocation5 + $0x100] sm:$0xff] %v491
    %1303 = vst [vmem:[#allocation5 + $0x108] sm:$0xff] %v493
    %1304 = vst [vmem:[#allocation5 + $0x110] sm:$0xff] %v594
    %1305 = vst [vmem:[#allocation5 + $0x118] sm:$0xff] %v596
    %1306 = vst [vmem:[#allocation5 + $0x120] sm:$0xff] %v697
    %1307 = vst [vmem:[#allocation5 + $0x128] sm:$0xff] %v699
    %1308 = vst [vmem:[#allocation5 + $0x130] sm:$0xff] %v800
    %1309 = vst [vmem:[#allocation5 + $0x138] sm:$0xff] %v802
    %1310 = vst [vmem:[#allocation5 + $0x140] sm:$0xff] %v903
    %1311 = vst [vmem:[#allocation5 + $0x148] sm:$0xff] %v905
    %1312 = vst [vmem:[#allocation5 + $0x150] sm:$0xff] %v1006
    %1313 = vst [vmem:[#allocation5 + $0x158] sm:$0xff] %v1008
    %1314 = vst [vmem:[#allocation5 + $0x160] sm:$0xff] %v1109
    %1315 = vst [vmem:[#allocation5 + $0x168] sm:$0xff] %v1111
    %1316 = vst [vmem:[#allocation5 + $0x170] sm:$0xff] %v1212
    %1317 = vst [vmem:[#allocation5 + $0x178] sm:$0xff] %v1214
    %1318 = vst [vmem:[#allocation5 + $0x180] sm:$0xff] %v495
    %1319 = vst [vmem:[#allocation5 + $0x188] sm:$0xff] %v497
    %1320 = vst [vmem:[#allocation5 + $0x190] sm:$0xff] %v598
    %1321 = vst [vmem:[#allocation5 + $0x198] sm:$0xff] %v600
    %1322 = vst [vmem:[#allocation5 + $0x1a0] sm:$0xff] %v701
    %1323 = vst [vmem:[#allocation5 + $0x1a8] sm:$0xff] %v703
    %1324 = vst [vmem:[#allocation5 + $0x1b0] sm:$0xff] %v804
    %1325 = vst [vmem:[#allocation5 + $0x1b8] sm:$0xff] %v806
    %1326 = vst [vmem:[#allocation5 + $0x1c0] sm:$0xff] %v907
    %1327 = vst [vmem:[#allocation5 + $0x1c8] sm:$0xff] %v909
    %1328 = vst [vmem:[#allocation5 + $0x1d0] sm:$0xff] %v1010
    %1329 = vst [vmem:[#allocation5 + $0x1d8] sm:$0xff] %v1012
    %1330 = vst [vmem:[#allocation5 + $0x1e0] sm:$0xff] %v1113
    %1331 = vst [vmem:[#allocation5 + $0x1e8] sm:$0xff] %v1115
    %1332 = vst [vmem:[#allocation5 + $0x1f0] sm:$0xff] %v1216
    %1333 = vst [vmem:[#allocation5 + $0x1f8] sm:$0xff] %v1218
    %1334 = vst [vmem:[#allocation5 + $0x200] sm:$0xff] %v501
    %1335 = vst [vmem:[#allocation5 + $0x208] sm:$0xff] %v503
    %1336 = vst [vmem:[#allocation5 + $0x210] sm:$0xff] %v604
    %1337 = vst [vmem:[#allocation5 + $0x218] sm:$0xff] %v606
    %1338 = vst [vmem:[#allocation5 + $0x220] sm:$0xff] %v707
    %1339 = vst [vmem:[#allocation5 + $0x228] sm:$0xff] %v709
    %1340 = vst [vmem:[#allocation5 + $0x230] sm:$0xff] %v810
    %1341 = vst [vmem:[#allocation5 + $0x238] sm:$0xff] %v812
    %1342 = vst [vmem:[#allocation5 + $0x240] sm:$0xff] %v913
    %1343 = vst [vmem:[#allocation5 + $0x248] sm:$0xff] %v915
    %1344 = vst [vmem:[#allocation5 + $0x250] sm:$0xff] %v1016
    %1345 = vst [vmem:[#allocation5 + $0x258] sm:$0xff] %v1018
    %1346 = vst [vmem:[#allocation5 + $0x260] sm:$0xff] %v1119
    %1347 = vst [vmem:[#allocation5 + $0x268] sm:$0xff] %v1121
    %1348 = vst [vmem:[#allocation5 + $0x270] sm:$0xff] %v1222
    %1349 = vst [vmem:[#allocation5 + $0x278] sm:$0xff] %v1224
    %1350 = vst [vmem:[#allocation5 + $0x280] sm:$0xff] %v505
    %1351 = vst [vmem:[#allocation5 + $0x288] sm:$0xff] %v507
    %1352 = vst [vmem:[#allocation5 + $0x290] sm:$0xff] %v608
    %1353 = vst [vmem:[#allocation5 + $0x298] sm:$0xff] %v610
    %1354 = vst [vmem:[#allocation5 + $0x2a0] sm:$0xff] %v711
    %1355 = vst [vmem:[#allocation5 + $0x2a8] sm:$0xff] %v713
    %1356 = vst [vmem:[#allocation5 + $0x2b0] sm:$0xff] %v814
    %1357 = vst [vmem:[#allocation5 + $0x2b8] sm:$0xff] %v816
    %1358 = vst [vmem:[#allocation5 + $0x2c0] sm:$0xff] %v917
    %1359 = vst [vmem:[#allocation5 + $0x2c8] sm:$0xff] %v919
    %1360 = vst [vmem:[#allocation5 + $0x2d0] sm:$0xff] %v1020
    %1361 = vst [vmem:[#allocation5 + $0x2d8] sm:$0xff] %v1022
    %1362 = vst [vmem:[#allocation5 + $0x2e0] sm:$0xff] %v1123
    %1363 = vst [vmem:[#allocation5 + $0x2e8] sm:$0xff] %v1125
    %1364 = vst [vmem:[#allocation5 + $0x2f0] sm:$0xff] %v1226
    %1365 = vst [vmem:[#allocation5 + $0x2f8] sm:$0xff] %v1228
    %1366 = vst [vmem:[#allocation5 + $0x300] sm:$0xff] %v511
    %1367 = vst [vmem:[#allocation5 + $0x308] sm:$0xff] %v513
    %1368 = vst [vmem:[#allocation5 + $0x310] sm:$0xff] %v614
    %1369 = vst [vmem:[#allocation5 + $0x318] sm:$0xff] %v616
    %1370 = vst [vmem:[#allocation5 + $0x320] sm:$0xff] %v717
    %1371 = vst [vmem:[#allocation5 + $0x328] sm:$0xff] %v719
    %1372 = vst [vmem:[#allocation5 + $0x330] sm:$0xff] %v820
    %1373 = vst [vmem:[#allocation5 + $0x338] sm:$0xff] %v822
    %1374 = vst [vmem:[#allocation5 + $0x340] sm:$0xff] %v923
    %1375 = vst [vmem:[#allocation5 + $0x348] sm:$0xff] %v925
    %1376 = vst [vmem:[#allocation5 + $0x350] sm:$0xff] %v1026
    %1377 = vst [vmem:[#allocation5 + $0x358] sm:$0xff] %v1028
    %1378 = vst [vmem:[#allocation5 + $0x360] sm:$0xff] %v1129
    %1379 = vst [vmem:[#allocation5 + $0x368] sm:$0xff] %v1131
    %1380 = vst [vmem:[#allocation5 + $0x370] sm:$0xff] %v1232
    %1381 = vst [vmem:[#allocation5 + $0x378] sm:$0xff] %v1234
    %1382 = vst [vmem:[#allocation5 + $0x380] sm:$0xff] %v515
    %1383 = vst [vmem:[#allocation5 + $0x388] sm:$0xff] %v517
    %1384 = vst [vmem:[#allocation5 + $0x390] sm:$0xff] %v618
    %1385 = vst [vmem:[#allocation5 + $0x398] sm:$0xff] %v620
    %1386 = vst [vmem:[#allocation5 + $0x3a0] sm:$0xff] %v721
    %1387 = vst [vmem:[#allocation5 + $0x3a8] sm:$0xff] %v723
    %1388 = vst [vmem:[#allocation5 + $0x3b0] sm:$0xff] %v824
    %1389 = vst [vmem:[#allocation5 + $0x3b8] sm:$0xff] %v826
    %1390 = vst [vmem:[#allocation5 + $0x3c0] sm:$0xff] %v927
    %1391 = vst [vmem:[#allocation5 + $0x3c8] sm:$0xff] %v929
    %1392 = vst [vmem:[#allocation5 + $0x3d0] sm:$0xff] %v1030
    %1393 = vst [vmem:[#allocation5 + $0x3d8] sm:$0xff] %v1032
    %1394 = vst [vmem:[#allocation5 + $0x3e0] sm:$0xff] %v1133
    %1395 = vst [vmem:[#allocation5 + $0x3e8] sm:$0xff] %v1135
    %1396 = vst [vmem:[#allocation5 + $0x3f0] sm:$0xff] %v1236
    %1397 = vst [vmem:[#allocation5 + $0x3f8] sm:$0xff] %v1238
    %1398 = vst [vmem:[#allocation5 + $0x400] sm:$0xff] %v521
    %1399 = vst [vmem:[#allocation5 + $0x408] sm:$0xff] %v523
    %1400 = vst [vmem:[#allocation5 + $0x410] sm:$0xff] %v624
    %1401 = vst [vmem:[#allocation5 + $0x418] sm:$0xff] %v626
    %1402 = vst [vmem:[#allocation5 + $0x420] sm:$0xff] %v727
    %1403 = vst [vmem:[#allocation5 + $0x428] sm:$0xff] %v729
    %1404 = vst [vmem:[#allocation5 + $0x430] sm:$0xff] %v830
    %1405 = vst [vmem:[#allocation5 + $0x438] sm:$0xff] %v832
    %1406 = vst [vmem:[#allocation5 + $0x440] sm:$0xff] %v933
    %1407 = vst [vmem:[#allocation5 + $0x448] sm:$0xff] %v935
    %1408 = vst [vmem:[#allocation5 + $0x450] sm:$0xff] %v1036
    %1409 = vst [vmem:[#allocation5 + $0x458] sm:$0xff] %v1038
    %1410 = vst [vmem:[#allocation5 + $0x460] sm:$0xff] %v1139
    %1411 = vst [vmem:[#allocation5 + $0x468] sm:$0xff] %v1141
    %1412 = vst [vmem:[#allocation5 + $0x470] sm:$0xff] %v1242
    %1413 = vst [vmem:[#allocation5 + $0x478] sm:$0xff] %v1244
    %1414 = vst [vmem:[#allocation5 + $0x480] sm:$0xff] %v525
    %1415 = vst [vmem:[#allocation5 + $0x488] sm:$0xff] %v527
    %1416 = vst [vmem:[#allocation5 + $0x490] sm:$0xff] %v628
    %1417 = vst [vmem:[#allocation5 + $0x498] sm:$0xff] %v630
    %1418 = vst [vmem:[#allocation5 + $0x4a0] sm:$0xff] %v731
    %1419 = vst [vmem:[#allocation5 + $0x4a8] sm:$0xff] %v733
    %1420 = vst [vmem:[#allocation5 + $0x4b0] sm:$0xff] %v834
    %1421 = vst [vmem:[#allocation5 + $0x4b8] sm:$0xff] %v836
    %1422 = vst [vmem:[#allocation5 + $0x4c0] sm:$0xff] %v937
    %1423 = vst [vmem:[#allocation5 + $0x4c8] sm:$0xff] %v939
    %1424 = vst [vmem:[#allocation5 + $0x4d0] sm:$0xff] %v1040
    %1425 = vst [vmem:[#allocation5 + $0x4d8] sm:$0xff] %v1042
    %1426 = vst [vmem:[#allocation5 + $0x4e0] sm:$0xff] %v1143
    %1427 = vst [vmem:[#allocation5 + $0x4e8] sm:$0xff] %v1145
    %1428 = vst [vmem:[#allocation5 + $0x4f0] sm:$0xff] %v1246
    %1429 = vst [vmem:[#allocation5 + $0x4f8] sm:$0xff] %v1248
    %1430 = vst [vmem:[#allocation5 + $0x500] sm:$0xff] %v531
    %1431 = vst [vmem:[#allocation5 + $0x508] sm:$0xff] %v533
    %1432 = vst [vmem:[#allocation5 + $0x510] sm:$0xff] %v634
    %1433 = vst [vmem:[#allocation5 + $0x518] sm:$0xff] %v636
    %1434 = vst [vmem:[#allocation5 + $0x520] sm:$0xff] %v737
    %1435 = vst [vmem:[#allocation5 + $0x528] sm:$0xff] %v739
    %1436 = vst [vmem:[#allocation5 + $0x530] sm:$0xff] %v840
    %1437 = vst [vmem:[#allocation5 + $0x538] sm:$0xff] %v842
    %1438 = vst [vmem:[#allocation5 + $0x540] sm:$0xff] %v943
    %1439 = vst [vmem:[#allocation5 + $0x548] sm:$0xff] %v945
    %1440 = vst [vmem:[#allocation5 + $0x550] sm:$0xff] %v1046
    %1441 = vst [vmem:[#allocation5 + $0x558] sm:$0xff] %v1048
    %1442 = vst [vmem:[#allocation5 + $0x560] sm:$0xff] %v1149
    %1443 = vst [vmem:[#allocation5 + $0x568] sm:$0xff] %v1151
    %1444 = vst [vmem:[#allocation5 + $0x570] sm:$0xff] %v1252
    %1445 = vst [vmem:[#allocation5 + $0x578] sm:$0xff] %v1254
    %1446 = vst [vmem:[#allocation5 + $0x580] sm:$0xff] %v535
    %1447 = vst [vmem:[#allocation5 + $0x588] sm:$0xff] %v537
    %1448 = vst [vmem:[#allocation5 + $0x590] sm:$0xff] %v638
    %1449 = vst [vmem:[#allocation5 + $0x598] sm:$0xff] %v640
    %1450 = vst [vmem:[#allocation5 + $0x5a0] sm:$0xff] %v741
    %1451 = vst [vmem:[#allocation5 + $0x5a8] sm:$0xff] %v743
    %1452 = vst [vmem:[#allocation5 + $0x5b0] sm:$0xff] %v844
    %1453 = vst [vmem:[#allocation5 + $0x5b8] sm:$0xff] %v846
    %1454 = vst [vmem:[#allocation5 + $0x5c0] sm:$0xff] %v947
    %1455 = vst [vmem:[#allocation5 + $0x5c8] sm:$0xff] %v949
    %1456 = vst [vmem:[#allocation5 + $0x5d0] sm:$0xff] %v1050
    %1457 = vst [vmem:[#allocation5 + $0x5d8] sm:$0xff] %v1052
    %1458 = vst [vmem:[#allocation5 + $0x5e0] sm:$0xff] %v1153
    %1459 = vst [vmem:[#allocation5 + $0x5e8] sm:$0xff] %v1155
    %1460 = vst [vmem:[#allocation5 + $0x5f0] sm:$0xff] %v1256
    %1461 = vst [vmem:[#allocation5 + $0x5f8] sm:$0xff] %v1258
    %1462 = vst [vmem:[#allocation5 + $0x600] sm:$0xff] %v541
    %1463 = vst [vmem:[#allocation5 + $0x608] sm:$0xff] %v543
    %1464 = vst [vmem:[#allocation5 + $0x610] sm:$0xff] %v644
    %1465 = vst [vmem:[#allocation5 + $0x618] sm:$0xff] %v646
    %1466 = vst [vmem:[#allocation5 + $0x620] sm:$0xff] %v747
    %1467 = vst [vmem:[#allocation5 + $0x628] sm:$0xff] %v749
    %1468 = vst [vmem:[#allocation5 + $0x630] sm:$0xff] %v850
    %1469 = vst [vmem:[#allocation5 + $0x638] sm:$0xff] %v852
    %1470 = vst [vmem:[#allocation5 + $0x640] sm:$0xff] %v953
    %1471 = vst [vmem:[#allocation5 + $0x648] sm:$0xff] %v955
    %1472 = vst [vmem:[#allocation5 + $0x650] sm:$0xff] %v1056
    %1473 = vst [vmem:[#allocation5 + $0x658] sm:$0xff] %v1058
    %1474 = vst [vmem:[#allocation5 + $0x660] sm:$0xff] %v1159
    %1475 = vst [vmem:[#allocation5 + $0x668] sm:$0xff] %v1161
    %1476 = vst [vmem:[#allocation5 + $0x670] sm:$0xff] %v1262
    %1477 = vst [vmem:[#allocation5 + $0x678] sm:$0xff] %v1264
    %1478 = vst [vmem:[#allocation5 + $0x680] sm:$0xff] %v545
    %1479 = vst [vmem:[#allocation5 + $0x688] sm:$0xff] %v547
    %1480 = vst [vmem:[#allocation5 + $0x690] sm:$0xff] %v648
    %1481 = vst [vmem:[#allocation5 + $0x698] sm:$0xff] %v650
    %1482 = vst [vmem:[#allocation5 + $0x6a0] sm:$0xff] %v751
    %1483 = vst [vmem:[#allocation5 + $0x6a8] sm:$0xff] %v753
    %1484 = vst [vmem:[#allocation5 + $0x6b0] sm:$0xff] %v854
    %1485 = vst [vmem:[#allocation5 + $0x6b8] sm:$0xff] %v856
    %1486 = vst [vmem:[#allocation5 + $0x6c0] sm:$0xff] %v957
    %1487 = vst [vmem:[#allocation5 + $0x6c8] sm:$0xff] %v959
    %1488 = vst [vmem:[#allocation5 + $0x6d0] sm:$0xff] %v1060
    %1489 = vst [vmem:[#allocation5 + $0x6d8] sm:$0xff] %v1062
    %1490 = vst [vmem:[#allocation5 + $0x6e0] sm:$0xff] %v1163
    %1491 = vst [vmem:[#allocation5 + $0x6e8] sm:$0xff] %v1165
    %1492 = vst [vmem:[#allocation5 + $0x6f0] sm:$0xff] %v1266
    %1493 = vst [vmem:[#allocation5 + $0x6f8] sm:$0xff] %v1268
    // Predicated region
    $region18: #{tpu_custom_call.1} parent=1 // pred_check
      _
    $region19: #{tpu_custom_call.1} parent=1 // pred_check_branch
      %1495 = sbr.rel (0) target = $region21
    $region20: #{tpu_custom_call.1} parent=1 // pred_region
      %s1497 = ssub.s32 28672, 28672
      %1498 = vsyncadd [#allocation4], %s1497
      %s1499 = sshll.u32 [#allocation5], 4
      %s1500 = int_to_ptr.vmem [resolvable:$true] %s1499
      %1505 = dma.vmem_to_hbm [thread:$0]  %s1500, 28672, %s3, [#allocation4], 2048, 2048, 128
    $region21: #{tpu_custom_call.1} parent=1 // pred_fallthru
      _
    // Predicated region
    $region22: #{tpu_custom_call.1} parent=1 // pred_check
      _
    $region23: #{tpu_custom_call.1} parent=1 // pred_check_branch
      %1507 = sbr.rel (0) target = $region25
    $region24: #{tpu_custom_call.1} parent=1 // pred_region
      %1508 = dma.done [#allocation4], 28672
    $region25: #{tpu_custom_call.1} parent=1 // pred_fallthru
      _
    %1509 = vsyncpa [#allocation3], 1
    %1510 = vsyncpa [#allocation4], 1

</llo_original>
